<compile_context>
chip_gen: v7x
topology: tpu7x:2x2x1
jax: 0.10.0
libtpu: 0.0.40
codegen_flags: <defaults>
</compile_context>

<pallas_src>
import functools

import jax
import jax.numpy as jnp
import numpy as np
from jax.experimental import pallas as pl
from jax.experimental.pallas import tpu as pltpu

R, RP = 200, 256      # representation width: logical / lane-padded
H, HP = 100, 128      # head hidden width:    logical / lane-padded
OUTP = 2 * HP         # fused head width & lane-dense output width


def _tpu_kind():
    try:
        return jax.devices()[0].device_kind.lower()
    except Exception:
        return ""


_KIND = _tpu_kind()
_IS_V7 = "v7" in _KIND
# bf16 VPU/EUP exist on v6e/v7x; older gens (v5e etc.) keep elementwise math in f32.
_ELU_BF16 = ("v6" in _KIND) or ("v7" in _KIND)


# ---------------------------------------------------------------------------
# Pallas kernel: fused representation MLP + fused (treat||control) head chain
# ---------------------------------------------------------------------------
def _cf_kernel(xc_ref, xp_ref, a_ref, wr1c_ref, wr1p_ref, wr2_ref,
               wh1r_ref, wh2_ref, wh3_ref, bias_ref, out_ref,
               *, a_dim, elu_bf16):
    cd = wr2_ref.dtype            # matmul input dtype (bfloat16)
    f32 = jnp.float32

    def elu_cast(pre_f32):
        # PyTorch nn.ELU(alpha=1.0). On v6e/v7x: one f32->bf16 cast of the
        # pre-activation, compare/select/exp run in bf16 and the result feeds the
        # next MXU dot directly. On v5e: elementwise math stays f32, cast once after.
        x = pre_f32.astype(cd) if elu_bf16 else pre_f32
        y = jnp.where(x > 0, x, jnp.exp(x) - 1.0)
        return y.astype(cd)

    xc = xc_ref[...].astype(cd)   # (TB, xc_dim) tiny per-block cast
    xp = xp_ref[...].astype(cd)   # (TB, xp_dim)
    a = a_ref[...]                # (TB, a_dim)  f32

    b_r1 = bias_ref[0:1, :]       # (1, 256) f32
    b_r2 = bias_ref[1:2, :]
    b_h1 = bias_ref[2:3, :]
    b_h2 = bias_ref[3:4, :]
    b_h3 = bias_ref[4:5, :]
    w_a = bias_ref[5:5 + a_dim, :]   # f32 'a' weights of the fused head layer 1

    # representation: Linear(xs_dim, 200->256) -> ELU -> Linear(256, 256)
    # (torch.cat((xc, xp), 1) @ W1 done as two row-block dots, no host-side concat)
    h_pre = (jnp.dot(xc, wr1c_ref[...], preferred_element_type=f32)
             + jnp.dot(xp, wr1p_ref[...], preferred_element_type=f32) + b_r1)
    h = elu_cast(h_pre)
    rep = (jnp.dot(h, wr2_ref[...], preferred_element_type=f32) + b_r2).astype(cd)

    # both outcome heads fused into one 256-wide chain:
    #   cols [0:128) -> treat head, cols [128:256) -> control head
    z = jnp.dot(rep, wh1r_ref[...], preferred_element_type=f32)
    if a_dim == 1:
        # rank-1 'a' contribution: f32 VPU broadcast multiply, no K=1 MXU push
        z = z + a * w_a
    else:
        z = z + jnp.dot(a, w_a, preferred_element_type=f32)
    z = elu_cast(z + b_h1)
    z = elu_cast(jnp.dot(z, wh2_ref[...], preferred_element_type=f32) + b_h2)

    # lane-dense (TB, 256) output: treat y at cols [0:y_dim), control at [128:128+y_dim)
    out_ref[...] = (jnp.dot(z, wh3_ref[...], preferred_element_type=f32)
                    + b_h3).astype(out_ref.dtype)


# ---------------------------------------------------------------------------
# Wrapper: batch tiling, resident weights, cost estimate
# ---------------------------------------------------------------------------
@functools.partial(jax.jit, static_argnames=("y_dim",))
def counterfactual_forward(xc, xp, a, packed, *, y_dim):
    xc = xc.astype(jnp.float32)
    xp = xp.astype(jnp.float32)
    a = a.astype(jnp.float32)

    B, xc_dim = xc.shape
    xp_dim = xp.shape[1]
    a_dim = a.shape[1]

    # Batch tiling: minimize pad rows, amortize ~0.35us/step grid overhead, and on
    # v7x keep >= 2 tiles so both TensorCores get work. Last block may be partial;
    # Pallas masks the edge (pad rows are row-independent through the MLP).
    min_tiles = 2 if _IS_V7 else 1
    n_tiles = max(min_tiles, pl.cdiv(B, 1024))
    TB = max(8, ((pl.cdiv(B, n_tiles) + 7) // 8) * 8)
    grid = (pl.cdiv(B, TB),)

    if _IS_V7 and grid[0] % 2 == 0 and hasattr(pltpu, "CORE_PARALLEL"):
        batch_sem = pltpu.CORE_PARALLEL      # actually shard the batch over both TCs
    else:
        batch_sem = "parallel"

    weights = ("wr1c", "wr1p", "wr2", "wh1r", "wh2", "wh3", "bias")
    args = [xc, xp, a] + [packed[k] for k in weights]

    batch_spec = lambda d: pl.BlockSpec((TB, d), lambda i: (i, 0))
    resident = lambda w: pl.BlockSpec(w.shape, lambda i: (0, 0))   # VMEM-resident
    in_specs = ([batch_spec(xc_dim), batch_spec(xp_dim), batch_spec(a_dim)]
                + [resident(packed[k]) for k in weights])

    B_pad = grid[0] * TB
    xs_dim = xc_dim + xp_dim
    flops = 2 * B_pad * (xs_dim * RP + RP * RP + RP * OUTP + a_dim * OUTP
                         + OUTP * OUTP + OUTP * OUTP)
    bytes_accessed = int(sum(int(np.prod(x.shape)) * x.dtype.itemsize for x in args)
                         + B * OUTP * 4)
    cost = pl.CostEstimate(flops=int(flops),
                           transcendentals=int(B_pad * (RP + 2 * OUTP)),
                           bytes_accessed=bytes_accessed)

    kernel = functools.partial(_cf_kernel, a_dim=a_dim, elu_bf16=_ELU_BF16)
    out = pl.pallas_call(
        kernel,
        grid=grid,
        in_specs=in_specs,
        out_specs=pl.BlockSpec((TB, OUTP), lambda i: (i, 0)),
        out_shape=jax.ShapeDtypeStruct((B, OUTP), jnp.float32),
        compiler_params=pltpu.CompilerParams(dimension_semantics=(batch_sem,)),
        cost_estimate=cost,
    )(*args)

    y_treat = out[:, :y_dim]
    y_control = out[:, HP:HP + y_dim]
    y_obs = (1.0 - a) * y_control + a * y_treat   # trivial blend, fused by XLA
    return y_obs, y_treat, y_control


# ---------------------------------------------------------------------------
# Parameter init (PyTorch-Linear-style) and host-side packing / padding
# ---------------------------------------------------------------------------
def init_params(key, xs_dim, a_dim, y_dim):
    keys = iter(jax.random.split(key, 32))

    def linear(in_f, out_f):
        k_w, k_b = next(keys), next(keys)
        bound = 1.0 / np.sqrt(in_f)
        w = jax.random.uniform(k_w, (in_f, out_f), jnp.float32, -bound, bound)
        b = jax.random.uniform(k_b, (out_f,), jnp.float32, -bound, bound)
        return w, b

    p = {}
    p["wr1"], p["br1"] = linear(xs_dim, R)
    p["wr2"], p["br2"] = linear(R, R)
    p["wt1"], p["bt1"] = linear(R + a_dim, H)
    p["wt2"], p["bt2"] = linear(H, H)
    p["wt3"], p["bt3"] = linear(H, y_dim)
    p["wc1"], p["bc1"] = linear(R + a_dim, H)
    p["wc2"], p["bc2"] = linear(H, H)
    p["wc3"], p["bc3"] = linear(H, y_dim)
    return p


def pack_params(p, xc_dim, xp_dim, a_dim, y_dim, compute_dtype=jnp.bfloat16):
    """Pad hidden dims to lane multiples, fuse the two heads, pack biases + 'a' weights."""
    assert RP == 2 * HP and y_dim <= HP
    zeros = lambda s: jnp.zeros(s, jnp.float32)

    wr1 = p["wr1"]                                       # (xc_dim + xp_dim, R)
    wr1c = zeros((xc_dim, RP)).at[:, :R].set(wr1[:xc_dim])
    wr1p = zeros((xp_dim, RP)).at[:, :R].set(wr1[xc_dim:])
    wr2 = zeros((RP, RP)).at[:R, :R].set(p["wr2"])

    wt1, wc1 = p["wt1"], p["wc1"]                        # (R + a_dim, H)
    wh1r = (zeros((RP, OUTP))
            .at[:R, :H].set(wt1[:R])
            .at[:R, HP:HP + H].set(wc1[:R]))
    wh2 = (zeros((OUTP, OUTP))                           # block-diagonal
           .at[:H, :H].set(p["wt2"])
           .at[HP:HP + H, HP:HP + H].set(p["wc2"]))
    wh3 = (zeros((OUTP, OUTP))                           # lane-dense output columns
           .at[:H, :y_dim].set(p["wt3"])
           .at[HP:HP + H, HP:HP + y_dim].set(p["wc3"]))

    bias = (zeros((5 + a_dim, RP))
            .at[0, :R].set(p["br1"])
            .at[1, :R].set(p["br2"])
            .at[2, :H].set(p["bt1"]).at[2, HP:HP + H].set(p["bc1"])
            .at[3, :H].set(p["bt2"]).at[3, HP:HP + H].set(p["bc2"])
            .at[4, :y_dim].set(p["bt3"]).at[4, HP:HP + y_dim].set(p["bc3"])
            # rows 5.. : f32 'a' weights of the fused head layer 1 (no per-step cast)
            .at[5:, :H].set(wt1[R:]).at[5:, HP:HP + H].set(wc1[R:]))

    cd = compute_dtype
    return {"wr1c": wr1c.astype(cd), "wr1p": wr1p.astype(cd),
            "wr2": wr2.astype(cd), "wh1r": wh1r.astype(cd),
            "wh2": wh2.astype(cd), "wh3": wh3.astype(cd),
            "bias": bias}          # biases + 'a' weights stay f32 for accuracy


# ---------------------------------------------------------------------------
# Pure-JAX f32 reference mirroring the PyTorch forward exactly
# ---------------------------------------------------------------------------
def reference_forward(xc, xp, a, p):
    def elu(x):
        return jnp.where(x > 0, x, jnp.exp(x) - 1.0)

    xs = jnp.concatenate([xc, xp], axis=1)
    rep = elu(xs @ p["wr1"] + p["br1"]) @ p["wr2"] + p["br2"]
    feat = jnp.concatenate([rep, a], axis=1)

    def head(w1, b1, w2, b2, w3, b3):
        z = elu(feat @ w1 + b1)
        z = elu(z @ w2 + b2)
        return z @ w3 + b3

    y_t = head(p["wt1"], p["bt1"], p["wt2"], p["bt2"], p["wt3"], p["bt3"])
    y_c = head(p["wc1"], p["bc1"], p["wc2"], p["bc2"], p["wc3"], p["bc3"])
    y_obs = (1.0 - a) * y_c + a * y_t
    return y_obs, y_t, y_c


if __name__ == "__main__":
    XC_DIM, XP_DIM, A_DIM, Y_DIM = 8, 8, 1, 1
    XS_DIM = XC_DIM + XP_DIM

    key = jax.random.PRNGKey(0)
    k_p, k_data = jax.random.split(key)
    params = init_params(k_p, XS_DIM, A_DIM, Y_DIM)
    packed = pack_params(params, XC_DIM, XP_DIM, A_DIM, Y_DIM,
                         compute_dtype=jnp.bfloat16)

    def run_and_check(batch, k):
        k_xc, k_xp, k_a = jax.random.split(k, 3)
        xc = jax.random.normal(k_xc, (batch, XC_DIM), jnp.float32)
        xp = jax.random.normal(k_xp, (batch, XP_DIM), jnp.float32)
        a = jax.random.bernoulli(k_a, 0.5, (batch, A_DIM)).astype(jnp.float32)

        outs = counterfactual_forward(xc, xp, a, packed, y_dim=Y_DIM)
        jax.block_until_ready(outs)
        y_obs, y_t, y_c = outs

        r_obs, r_t, r_c = reference_forward(xc, xp, a, params)
        # bf16 matmul inputs (and bf16 ELU on v6e/v7x) with f32 accumulation
        np.testing.assert_allclose(np.asarray(y_t), np.asarray(r_t), rtol=5e-2, atol=5e-2)
        np.testing.assert_allclose(np.asarray(y_c), np.asarray(r_c), rtol=5e-2, atol=5e-2)
        np.testing.assert_allclose(np.asarray(y_obs), np.asarray(r_obs), rtol=5e-2, atol=5e-2)

    k1, k2 = jax.random.split(k_data)
    run_and_check(32, k1)    # exact tile (TB=32)
    run_and_check(300, k2)   # non-multiple-of-8 batch -> partial edge block path

    print("KERNEL_OK")
</pallas_src>

<mosaic_0001>
module attributes {stable_mosaic.version = 11 : i64} {
  func.func @_cf_kernel(%arg0: i32, %arg1: memref<32x8xf32, #tpu.memory_space<vmem>>, %arg2: memref<32x8xf32, #tpu.memory_space<vmem>>, %arg3: memref<32x1xf32, #tpu.memory_space<vmem>>, %arg4: memref<8x256xbf16, #tpu.memory_space<vmem>>, %arg5: memref<8x256xbf16, #tpu.memory_space<vmem>>, %arg6: memref<256x256xbf16, #tpu.memory_space<vmem>>, %arg7: memref<256x256xbf16, #tpu.memory_space<vmem>>, %arg8: memref<256x256xbf16, #tpu.memory_space<vmem>>, %arg9: memref<256x256xbf16, #tpu.memory_space<vmem>>, %arg10: memref<6x256xf32, #tpu.memory_space<vmem>>, %arg11: memref<32x256xf32, #tpu.memory_space<vmem>>) attributes {dimension_semantics = [#tpu.dimension_semantics<parallel>], iteration_bounds = array<i64: 1>, scalar_prefetch = 0 : i64, scratch_operands = 0 : i64, tpu.core_type = #tpu.core_type<tc>, window_params = [{transform_indices = @transform_0, window_bounds = array<i64: 32, 8>}, {transform_indices = @transform_1, window_bounds = array<i64: 32, 8>}, {transform_indices = @transform_2, window_bounds = array<i64: 32, 1>}, {pipeline_mode = #tpu.pipeline_mode<synchronous>, transform_indices = @transform_3, window_bounds = array<i64: 8, 256>}, {pipeline_mode = #tpu.pipeline_mode<synchronous>, transform_indices = @transform_4, window_bounds = array<i64: 8, 256>}, {pipeline_mode = #tpu.pipeline_mode<synchronous>, transform_indices = @transform_5, window_bounds = array<i64: 256, 256>}, {pipeline_mode = #tpu.pipeline_mode<synchronous>, transform_indices = @transform_6, window_bounds = array<i64: 256, 256>}, {pipeline_mode = #tpu.pipeline_mode<synchronous>, transform_indices = @transform_7, window_bounds = array<i64: 256, 256>}, {pipeline_mode = #tpu.pipeline_mode<synchronous>, transform_indices = @transform_8, window_bounds = array<i64: 256, 256>}, {pipeline_mode = #tpu.pipeline_mode<synchronous>, transform_indices = @transform_9, window_bounds = array<i64: 6, 256>}, {transform_indices = @transform_10, window_bounds = array<i64: 32, 256>}]} {
    %c0 = arith.constant 0 : index
    %c0_0 = arith.constant 0 : index
    %0 = vector.load %arg1[%c0, %c0_0] : memref<32x8xf32, #tpu.memory_space<vmem>>, vector<32x8xf32>
    %1 = arith.truncf %0 : vector<32x8xf32> to vector<32x8xbf16>
    %c0_1 = arith.constant 0 : index
    %c0_2 = arith.constant 0 : index
    %2 = vector.load %arg2[%c0_1, %c0_2] : memref<32x8xf32, #tpu.memory_space<vmem>>, vector<32x8xf32>
    %3 = arith.truncf %2 : vector<32x8xf32> to vector<32x8xbf16>
    %c0_3 = arith.constant 0 : index
    %c0_4 = arith.constant 0 : index
    %4 = vector.load %arg3[%c0_3, %c0_4] : memref<32x1xf32, #tpu.memory_space<vmem>>, vector<32x1xf32>
    %c0_5 = arith.constant 0 : index
    %c0_6 = arith.constant 0 : index
    %5 = vector.load %arg10[%c0_5, %c0_6] : memref<6x256xf32, #tpu.memory_space<vmem>>, vector<1x256xf32>
    %c1 = arith.constant 1 : index
    %c0_7 = arith.constant 0 : index
    %6 = vector.load %arg10[%c1, %c0_7] : memref<6x256xf32, #tpu.memory_space<vmem>>, vector<1x256xf32>
    %c2 = arith.constant 2 : index
    %c0_8 = arith.constant 0 : index
    %7 = vector.load %arg10[%c2, %c0_8] : memref<6x256xf32, #tpu.memory_space<vmem>>, vector<1x256xf32>
    %c3 = arith.constant 3 : index
    %c0_9 = arith.constant 0 : index
    %8 = vector.load %arg10[%c3, %c0_9] : memref<6x256xf32, #tpu.memory_space<vmem>>, vector<1x256xf32>
    %c4 = arith.constant 4 : index
    %c0_10 = arith.constant 0 : index
    %9 = vector.load %arg10[%c4, %c0_10] : memref<6x256xf32, #tpu.memory_space<vmem>>, vector<1x256xf32>
    %c5 = arith.constant 5 : index
    %c0_11 = arith.constant 0 : index
    %10 = vector.load %arg10[%c5, %c0_11] : memref<6x256xf32, #tpu.memory_space<vmem>>, vector<1x256xf32>
    %c0_12 = arith.constant 0 : index
    %c0_13 = arith.constant 0 : index
    %11 = vector.load %arg4[%c0_12, %c0_13] : memref<8x256xbf16, #tpu.memory_space<vmem>>, vector<8x256xbf16>
    %cst = arith.constant dense<0.000000e+00> : vector<32x256xf32>
    %12 = tpu.matmul %1, %11, %cst {dimension_numbers = #tpu.dot_dimension_numbers<[1], [0], [0], [1], [0, 0, 1, 1], [], []>} : vector<32x8xbf16>, vector<8x256xbf16>, vector<32x256xf32> -> vector<32x256xf32>
    %c0_14 = arith.constant 0 : index
    %c0_15 = arith.constant 0 : index
    %13 = vector.load %arg5[%c0_14, %c0_15] : memref<8x256xbf16, #tpu.memory_space<vmem>>, vector<8x256xbf16>
    %cst_16 = arith.constant dense<0.000000e+00> : vector<32x256xf32>
    %14 = tpu.matmul %3, %13, %cst_16 {dimension_numbers = #tpu.dot_dimension_numbers<[1], [0], [0], [1], [0, 0, 1, 1], [], []>} : vector<32x8xbf16>, vector<8x256xbf16>, vector<32x256xf32> -> vector<32x256xf32>
    %15 = arith.addf %12, %14 : vector<32x256xf32>
    %16 = vector.broadcast %5 : vector<1x256xf32> to vector<32x256xf32>
    %17 = arith.addf %15, %16 : vector<32x256xf32>
    %cst_17 = arith.constant 0.000000e+00 : f32
    %18 = vector.broadcast %cst_17 : f32 to vector<32x256xf32>
    %19 = arith.cmpf ogt, %17, %18 : vector<32x256xf32>
    %20 = math.exp %17 : vector<32x256xf32>
    %cst_18 = arith.constant 1.000000e+00 : f32
    %21 = vector.broadcast %cst_18 : f32 to vector<32x256xf32>
    %22 = arith.subf %20, %21 : vector<32x256xf32>
    %23 = arith.select %19, %17, %22 : vector<32x256xi1>, vector<32x256xf32>
    %24 = arith.truncf %23 : vector<32x256xf32> to vector<32x256xbf16>
    %c0_19 = arith.constant 0 : index
    %c0_20 = arith.constant 0 : index
    %25 = vector.load %arg6[%c0_19, %c0_20] : memref<256x256xbf16, #tpu.memory_space<vmem>>, vector<256x256xbf16>
    %cst_21 = arith.constant dense<0.000000e+00> : vector<32x256xf32>
    %26 = tpu.matmul %24, %25, %cst_21 {dimension_numbers = #tpu.dot_dimension_numbers<[1], [0], [0], [1], [0, 0, 1, 1], [], []>} : vector<32x256xbf16>, vector<256x256xbf16>, vector<32x256xf32> -> vector<32x256xf32>
    %27 = vector.broadcast %6 : vector<1x256xf32> to vector<32x256xf32>
    %28 = arith.addf %26, %27 : vector<32x256xf32>
    %29 = arith.truncf %28 : vector<32x256xf32> to vector<32x256xbf16>
    %c0_22 = arith.constant 0 : index
    %c0_23 = arith.constant 0 : index
    %30 = vector.load %arg7[%c0_22, %c0_23] : memref<256x256xbf16, #tpu.memory_space<vmem>>, vector<256x256xbf16>
    %cst_24 = arith.constant dense<0.000000e+00> : vector<32x256xf32>
    %31 = tpu.matmul %29, %30, %cst_24 {dimension_numbers = #tpu.dot_dimension_numbers<[1], [0], [0], [1], [0, 0, 1, 1], [], []>} : vector<32x256xbf16>, vector<256x256xbf16>, vector<32x256xf32> -> vector<32x256xf32>
    %32 = vector.broadcast %4 : vector<32x1xf32> to vector<32x256xf32>
    %33 = vector.broadcast %10 : vector<1x256xf32> to vector<32x256xf32>
    %34 = arith.mulf %32, %33 : vector<32x256xf32>
    %35 = arith.addf %31, %34 : vector<32x256xf32>
    %36 = vector.broadcast %7 : vector<1x256xf32> to vector<32x256xf32>
    %37 = arith.addf %35, %36 : vector<32x256xf32>
    %cst_25 = arith.constant 0.000000e+00 : f32
    %38 = vector.broadcast %cst_25 : f32 to vector<32x256xf32>
    %39 = arith.cmpf ogt, %37, %38 : vector<32x256xf32>
    %40 = math.exp %37 : vector<32x256xf32>
    %cst_26 = arith.constant 1.000000e+00 : f32
    %41 = vector.broadcast %cst_26 : f32 to vector<32x256xf32>
    %42 = arith.subf %40, %41 : vector<32x256xf32>
    %43 = arith.select %39, %37, %42 : vector<32x256xi1>, vector<32x256xf32>
    %44 = arith.truncf %43 : vector<32x256xf32> to vector<32x256xbf16>
    %c0_27 = arith.constant 0 : index
    %c0_28 = arith.constant 0 : index
    %45 = vector.load %arg8[%c0_27, %c0_28] : memref<256x256xbf16, #tpu.memory_space<vmem>>, vector<256x256xbf16>
    %cst_29 = arith.constant dense<0.000000e+00> : vector<32x256xf32>
    %46 = tpu.matmul %44, %45, %cst_29 {dimension_numbers = #tpu.dot_dimension_numbers<[1], [0], [0], [1], [0, 0, 1, 1], [], []>} : vector<32x256xbf16>, vector<256x256xbf16>, vector<32x256xf32> -> vector<32x256xf32>
    %47 = vector.broadcast %8 : vector<1x256xf32> to vector<32x256xf32>
    %48 = arith.addf %46, %47 : vector<32x256xf32>
    %cst_30 = arith.constant 0.000000e+00 : f32
    %49 = vector.broadcast %cst_30 : f32 to vector<32x256xf32>
    %50 = arith.cmpf ogt, %48, %49 : vector<32x256xf32>
    %51 = math.exp %48 : vector<32x256xf32>
    %cst_31 = arith.constant 1.000000e+00 : f32
    %52 = vector.broadcast %cst_31 : f32 to vector<32x256xf32>
    %53 = arith.subf %51, %52 : vector<32x256xf32>
    %54 = arith.select %50, %48, %53 : vector<32x256xi1>, vector<32x256xf32>
    %55 = arith.truncf %54 : vector<32x256xf32> to vector<32x256xbf16>
    %c0_32 = arith.constant 0 : index
    %c0_33 = arith.constant 0 : index
    %56 = vector.load %arg9[%c0_32, %c0_33] : memref<256x256xbf16, #tpu.memory_space<vmem>>, vector<256x256xbf16>
    %cst_34 = arith.constant dense<0.000000e+00> : vector<32x256xf32>
    %57 = tpu.matmul %55, %56, %cst_34 {dimension_numbers = #tpu.dot_dimension_numbers<[1], [0], [0], [1], [0, 0, 1, 1], [], []>} : vector<32x256xbf16>, vector<256x256xbf16>, vector<32x256xf32> -> vector<32x256xf32>
    %58 = vector.broadcast %9 : vector<1x256xf32> to vector<32x256xf32>
    %59 = arith.addf %57, %58 : vector<32x256xf32>
    %c0_35 = arith.constant 0 : index
    %c0_36 = arith.constant 0 : index
    %60 = vector.load %arg11[%c0_35, %c0_36] : memref<32x256xf32, #tpu.memory_space<vmem>>, vector<32x256xf32>
    tpu.vector_store %arg11[%c0_35, %c0_36], %59 {strides = array<i32>} : memref<32x256xf32, #tpu.memory_space<vmem>>, vector<32x256xf32>,
    return
  }
  func.func @transform_0(%arg0: i32) -> (i32, i32) {
    %c0_i32 = arith.constant 0 : i32
    %c0_i32_0 = arith.constant 0 : i32
    return %arg0, %c0_i32 : i32, i32
  }
  func.func @transform_1(%arg0: i32) -> (i32, i32) {
    %c0_i32 = arith.constant 0 : i32
    %c0_i32_0 = arith.constant 0 : i32
    return %arg0, %c0_i32 : i32, i32
  }
  func.func @transform_2(%arg0: i32) -> (i32, i32) {
    %c0_i32 = arith.constant 0 : i32
    %c0_i32_0 = arith.constant 0 : i32
    return %arg0, %c0_i32 : i32, i32
  }
  func.func @transform_3(%arg0: i32) -> (i32, i32) {
    %c0_i32 = arith.constant 0 : i32
    %c0_i32_0 = arith.constant 0 : i32
    %c0_i32_1 = arith.constant 0 : i32
    return %c0_i32, %c0_i32_0 : i32, i32
  }
  func.func @transform_4(%arg0: i32) -> (i32, i32) {
    %c0_i32 = arith.constant 0 : i32
    %c0_i32_0 = arith.constant 0 : i32
    %c0_i32_1 = arith.constant 0 : i32
    return %c0_i32, %c0_i32_0 : i32, i32
  }
  func.func @transform_5(%arg0: i32) -> (i32, i32) {
    %c0_i32 = arith.constant 0 : i32
    %c0_i32_0 = arith.constant 0 : i32
    %c0_i32_1 = arith.constant 0 : i32
    return %c0_i32, %c0_i32_0 : i32, i32
  }
  func.func @transform_6(%arg0: i32) -> (i32, i32) {
    %c0_i32 = arith.constant 0 : i32
    %c0_i32_0 = arith.constant 0 : i32
    %c0_i32_1 = arith.constant 0 : i32
    return %c0_i32, %c0_i32_0 : i32, i32
  }
  func.func @transform_7(%arg0: i32) -> (i32, i32) {
    %c0_i32 = arith.constant 0 : i32
    %c0_i32_0 = arith.constant 0 : i32
    %c0_i32_1 = arith.constant 0 : i32
    return %c0_i32, %c0_i32_0 : i32, i32
  }
  func.func @transform_8(%arg0: i32) -> (i32, i32) {
    %c0_i32 = arith.constant 0 : i32
    %c0_i32_0 = arith.constant 0 : i32
    %c0_i32_1 = arith.constant 0 : i32
    return %c0_i32, %c0_i32_0 : i32, i32
  }
  func.func @transform_9(%arg0: i32) -> (i32, i32) {
    %c0_i32 = arith.constant 0 : i32
    %c0_i32_0 = arith.constant 0 : i32
    %c0_i32_1 = arith.constant 0 : i32
    return %c0_i32, %c0_i32_0 : i32, i32
  }
  func.func @transform_10(%arg0: i32) -> (i32, i32) {
    %c0_i32 = arith.constant 0 : i32
    %c0_i32_0 = arith.constant 0 : i32
    return %arg0, %c0_i32 : i32, i32
  }
}

</mosaic_0001>

<llo_original>
// kernel: counterfactual_forward.1
$region0: #{counterfactual_forward.1}
  #allocation0 [shape = 'u32[]', space=smem, size = 0x4, offset = 0x4, fixed_abs, tag = 'smem constant byte address 0x4 - core index']
  #allocation1 [shape = 'u32[144,128]{1,0:T(1,128)}', space=vmem, size = 0x12000, scoped, tag = 'internal scratch']
  %s0 = inlined_call_operand.vmem [shape: f32[32,8], index: 0, kind: input, shape index: {}]
  %s1 = inlined_call_operand.vmem [shape: f32[32,8], index: 1, kind: input, shape index: {}]
  %s2 = inlined_call_operand.vmem [shape: f32[32,1], index: 2, kind: input, shape index: {}]
  %s3 = inlined_call_operand.vmem [shape: bf16[8,256], index: 3, kind: input, shape index: {}]
  %s4 = inlined_call_operand.vmem [shape: bf16[8,256], index: 4, kind: input, shape index: {}]
  %s5 = inlined_call_operand.hbm [shape: bf16[256,256], index: 5, kind: input, shape index: {}]
  %s6 = inlined_call_operand.hbm [shape: bf16[256,256], index: 6, kind: input, shape index: {}]
  %s7 = inlined_call_operand.hbm [shape: bf16[256,256], index: 7, kind: input, shape index: {}]
  %s8 = inlined_call_operand.hbm [shape: bf16[256,256], index: 8, kind: input, shape index: {}]
  %s9 = inlined_call_operand.vmem [shape: f32[6,256], index: 9, kind: input, shape index: {}]
  %s10 = inlined_call_operand.vmem [shape: f32[32,256], index: 10, kind: output, shape index: {}]
  %s11 = sld [smem:[#allocation0]]
  $region66: #{counterfactual_forward.1} parent=0
    _
  %s13 = ssub.s32 1, %s11
  %s14 = scalar_select 0, %s13, %s11
  $region1: #{counterfactual_forward.1} parent=0
    #allocation2 [shape = 'u8[131072]{0}', space=vmem, size = 0x20000, scoped, tag = 'input window, operand 5, single buffered']
    #allocation3 [shape = 's32[1]{0}', space=sflag, size = 0x4, scoped, tag = 'scoped memory for counterfactual_forward.1']
    #allocation4 [shape = 'u8[131072]{0}', space=vmem, size = 0x20000, scoped, tag = 'input window, operand 6, single buffered']
    #allocation5 [shape = 's32[1]{0}', space=sflag, size = 0x4, scoped, tag = 'scoped memory for counterfactual_forward.1']
    #allocation6 [shape = 'u8[131072]{0}', space=vmem, size = 0x20000, scoped, tag = 'input window, operand 7, single buffered']
    #allocation7 [shape = 'u8[131072]{0}', space=vmem, size = 0x20000, scoped, tag = 'input window, operand 8, single buffered']
    #allocation8 [shape = 's32[1]{0}', space=sflag, size = 0x4, scoped, tag = 'scoped memory for counterfactual_forward.1']
    %15 = vsyncpa [#allocation3], 0
    %16 = vsyncpa [#allocation5], 0
    %17 = vsyncpa [#allocation8], 0
    // Predicated region
    $region2: #{counterfactual_forward.1} parent=1 // pred_check
      _
    $region3: #{counterfactual_forward.1} parent=1 // pred_check_branch
      %19 = sbr.rel (0) target = $region5
    $region4: #{counterfactual_forward.1} parent=1 // pred_region
      _
    $region5: #{counterfactual_forward.1} parent=1 // pred_fallthru
      _
    // Predicated region
    $region6: #{counterfactual_forward.1} parent=1 // pred_check
      _
    $region7: #{counterfactual_forward.1} parent=1 // pred_check_branch
      %21 = sbr.rel (0) target = $region9
    $region8: #{counterfactual_forward.1} parent=1 // pred_region
      _
    $region9: #{counterfactual_forward.1} parent=1 // pred_fallthru
      _
    // Predicated region
    $region10: #{counterfactual_forward.1} parent=1 // pred_check
      _
    $region11: #{counterfactual_forward.1} parent=1 // pred_check_branch
      %23 = sbr.rel (0) target = $region13
    $region12: #{counterfactual_forward.1} parent=1 // pred_region
      _
    $region13: #{counterfactual_forward.1} parent=1 // pred_fallthru
      _
    // Predicated region
    $region14: #{counterfactual_forward.1} parent=1 // pred_check
      _
    $region15: #{counterfactual_forward.1} parent=1 // pred_check_branch
      %25 = sbr.rel (0) target = $region17
    $region16: #{counterfactual_forward.1} parent=1 // pred_region
      _
    $region17: #{counterfactual_forward.1} parent=1 // pred_fallthru
      _
    // Predicated region
    $region18: #{counterfactual_forward.1} parent=1 // pred_check
      _
    $region19: #{counterfactual_forward.1} parent=1 // pred_check_branch
      %27 = sbr.rel (0) target = $region21
    $region20: #{counterfactual_forward.1} parent=1 // pred_region
      _
    $region21: #{counterfactual_forward.1} parent=1 // pred_fallthru
      _
    // Predicated region
    $region22: #{counterfactual_forward.1} parent=1 // pred_check
      _
    $region23: #{counterfactual_forward.1} parent=1 // pred_check_branch
      %29 = sbr.rel (0) target = $region25
    $region24: #{counterfactual_forward.1} parent=1 // pred_region
      %s31 = ssub.s32 4096, 4096
      %32 = vsyncadd [#allocation3], %s31
      %s33 = sshll.u32 [#allocation2], 4
      %s34 = int_to_ptr.vmem [resolvable:$true] %s33
      %39 = dma.hbm_to_vmem [thread:$0]  %s5, 4096, %s34, [#allocation3], 128, 128, 8
    $region25: #{counterfactual_forward.1} parent=1 // pred_fallthru
      _
    // Predicated region
    $region26: #{counterfactual_forward.1} parent=1 // pred_check
      _
    $region27: #{counterfactual_forward.1} parent=1 // pred_check_branch
      %41 = sbr.rel (0) target = $region29
    $region28: #{counterfactual_forward.1} parent=1 // pred_region
      %s43 = ssub.s32 4096, 4096
      %44 = vsyncadd [#allocation5], %s43
      %s45 = sshll.u32 [#allocation4], 4
      %s46 = int_to_ptr.vmem [resolvable:$true] %s45
      %51 = dma.hbm_to_vmem [thread:$0]  %s6, 4096, %s46, [#allocation5], 128, 128, 8
    $region29: #{counterfactual_forward.1} parent=1 // pred_fallthru
      _
    // Predicated region
    $region30: #{counterfactual_forward.1} parent=1 // pred_check
      _
    $region31: #{counterfactual_forward.1} parent=1 // pred_check_branch
      %53 = sbr.rel (0) target = $region33
    $region32: #{counterfactual_forward.1} parent=1 // pred_region
      %s55 = ssub.s32 4096, 4096
      %56 = vsyncadd [#allocation5], %s55
      %s57 = sshll.u32 [#allocation6], 4
      %s58 = int_to_ptr.vmem [resolvable:$true] %s57
      %63 = dma.hbm_to_vmem [thread:$0]  %s7, 4096, %s58, [#allocation5], 128, 128, 8
    $region33: #{counterfactual_forward.1} parent=1 // pred_fallthru
      _
    // Predicated region
    $region34: #{counterfactual_forward.1} parent=1 // pred_check
      _
    $region35: #{counterfactual_forward.1} parent=1 // pred_check_branch
      %65 = sbr.rel (0) target = $region37
    $region36: #{counterfactual_forward.1} parent=1 // pred_region
      %s67 = ssub.s32 4096, 4096
      %68 = vsyncadd [#allocation8], %s67
      %s69 = sshll.u32 [#allocation7], 4
      %s70 = int_to_ptr.vmem [resolvable:$true] %s69
      %75 = dma.hbm_to_vmem [thread:$0]  %s8, 4096, %s70, [#allocation8], 128, 128, 8
    $region37: #{counterfactual_forward.1} parent=1 // pred_fallthru
      _
    // Predicated region
    $region38: #{counterfactual_forward.1} parent=1 // pred_check
      _
    $region39: #{counterfactual_forward.1} parent=1 // pred_check_branch
      %77 = sbr.rel (0) target = $region41
    $region40: #{counterfactual_forward.1} parent=1 // pred_region
      _
    $region41: #{counterfactual_forward.1} parent=1 // pred_fallthru
      _
    // Predicated region
    $region42: #{counterfactual_forward.1} parent=1 // pred_check
      _
    $region43: #{counterfactual_forward.1} parent=1 // pred_check_branch
      %79 = sbr.rel (0) target = $region45
    $region44: #{counterfactual_forward.1} parent=1 // pred_region
      %80 = dma.done [#allocation3], 4096
    $region45: #{counterfactual_forward.1} parent=1 // pred_fallthru
      _
    // Predicated region
    $region46: #{counterfactual_forward.1} parent=1 // pred_check
      _
    $region47: #{counterfactual_forward.1} parent=1 // pred_check_branch
      %82 = sbr.rel (0) target = $region49
    $region48: #{counterfactual_forward.1} parent=1 // pred_region
      %83 = dma.done [#allocation5], 4096
    $region49: #{counterfactual_forward.1} parent=1 // pred_fallthru
      _
    // Predicated region
    $region50: #{counterfactual_forward.1} parent=1 // pred_check
      _
    $region51: #{counterfactual_forward.1} parent=1 // pred_check_branch
      %85 = sbr.rel (0) target = $region53
    $region52: #{counterfactual_forward.1} parent=1 // pred_region
      %86 = dma.done [#allocation5], 4096
    $region53: #{counterfactual_forward.1} parent=1 // pred_fallthru
      _
    // Predicated region
    $region54: #{counterfactual_forward.1} parent=1 // pred_check
      _
    $region55: #{counterfactual_forward.1} parent=1 // pred_check_branch
      %88 = sbr.rel (0) target = $region57
    $region56: #{counterfactual_forward.1} parent=1 // pred_region
      %89 = dma.done [#allocation8], 4096
    $region57: #{counterfactual_forward.1} parent=1 // pred_fallthru
      _
    %v91 = vld [vmem:[%s0] sm:$0xff]
    %v92 = vld [vmem:[%s0 + $0x8] sm:$0xff]
    %v93 = vld [vmem:[%s0 + $0x10] sm:$0xff]
    %v94 = vld [vmem:[%s0 + $0x18] sm:$0xff]
    %v95 = vpack.c.bf16 %v92, %v91
    %v96 = vpack.c.bf16 %v94, %v93
    %v97 = vld [vmem:[%s1] sm:$0xff]
    %v98 = vld [vmem:[%s1 + $0x8] sm:$0xff]
    %v99 = vld [vmem:[%s1 + $0x10] sm:$0xff]
    %v100 = vld [vmem:[%s1 + $0x18] sm:$0xff]
    %v101 = vpack.c.bf16 %v98, %v97
    %v102 = vpack.c.bf16 %v100, %v99
    %v103 = vld [vmem:[%s2] sm:$0xff]
    %v104 = vld [vmem:[%s2 + $0x8] sm:$0xff]
    %v105 = vld [vmem:[%s2 + $0x10] sm:$0xff]
    %v106 = vld [vmem:[%s2 + $0x18] sm:$0xff]
    %v107 = vld [vmem:[%s9] ss:$8 sm:$0x3]
    %s108 = scalar_lea.vmem %s9, 1
    %v109 = vld [vmem:[%s108] ss:$8 sm:$0x3]
    %s110 = scalar_lea.vmem %s9, 2
    %v111 = vld [vmem:[%s110] ss:$8 sm:$0x3]
    %s112 = scalar_lea.vmem %s9, 3
    %v113 = vld [vmem:[%s112] ss:$8 sm:$0x3]
    %s114 = scalar_lea.vmem %s9, 4
    %v115 = vld [vmem:[%s114] ss:$8 sm:$0x3]
    %s116 = scalar_lea.vmem %s9, 5
    %v117 = vld [vmem:[%s116] ss:$8 sm:$0x3]
    %v118 = vld [vmem:[%s3] sm:$0xff]
    %v119 = vld [vmem:[%s4] sm:$0xff]
    %v121 = vunpack.c.l.b16 %v119
    %v122 = vunpack.c.h.b16 %v119
    %v123 = vpack.c.b16 %v121, %v121
    %v124 = vpack.c.b16 %v122, %v122
    %vm125 = vcmask 64512
    %v127 = vsel %vm125, %v101, 0
    %v130 = vsel %vm125, %v102, 0
    %vm132 = vcmask 1043456
    %v134 = vsel %vm132, %v123, 0
    %v137 = vsel %vm132, %v124, 0
    %139 = vmatprep.subr.bf16.mxu0 %v137
    %140 = vmatpush1.bf16.msra.mxu0 %v134
    %141 = vmatprep.subr.bf16.mxu0 0
    %142 = vmatpush1.bf16.msra.mxu0 0
    %143 = vmatprep.subr.bf16.mxu0 0
    %144 = vmatpush1.bf16.msra.mxu0 0
    %145 = vmatprep.subr.bf16.mxu0 0
    %146 = vmatpush1.bf16.msra.mxu0 0
    %147 = vmatprep.subr.bf16.mxu0 0
    %148 = vmatpush1.bf16.msra.mxu0 0
    %149 = vmatprep.subr.bf16.mxu0 0
    %150 = vmatpush1.bf16.msra.mxu0 0
    %151 = vmatprep.subr.bf16.mxu0 0
    %152 = vmatpush1.bf16.msra.mxu0 0
    %153 = vmatprep.subr.bf16.mxu0 0
    %154 = vmatpush1.bf16.msra.mxu0 0
    %155 = vmatprep.subr.bf16.mxu0 0
    %156 = vmatpush1.bf16.msra.mxu0 0
    %157 = vmatprep.subr.bf16.mxu0 0
    %158 = vmatpush1.bf16.msra.mxu0 0
    %159 = vmatprep.subr.bf16.mxu0 0
    %160 = vmatpush1.bf16.msra.mxu0 0
    %161 = vmatprep.subr.bf16.mxu0 0
    %162 = vmatpush1.bf16.msra.mxu0 0
    %163 = vmatprep.subr.bf16.mxu0 0
    %164 = vmatpush1.bf16.msra.mxu0 0
    %165 = vmatprep.subr.bf16.mxu0 0
    %166 = vmatpush1.bf16.msra.mxu0 0
    %167 = vmatprep.subr.bf16.mxu0 0
    %168 = vmatpush1.bf16.msra.mxu0 0
    %169 = vmatprep.subr.bf16.mxu0 0
    %170 = vmatpush1.bf16.msra.mxu0 0
    %171 = vmatprep.mubr.bf16.mxu0 0
    %172 = vmatmul.mubr.bf16.gmra.mrb[0].mxu0 %v127
    %v173 = vpop.f32.mrb[0].mxu0
    %v174 = vadd.f32 0.0, %v173
    %v175 = vpop.f32.mrb[0].mxu0
    %v176 = vadd.f32 0.0, %v175
    %v177 = vpop.f32.mrb[0].mxu0
    %v178 = vadd.f32 0.0, %v177
    %v179 = vpop.f32.mrb[0].mxu0
    %v180 = vadd.f32 0.0, %v179
    %181 = vmatprep.mubr.bf16.mxu0 0
    %182 = vmatmul.mubr.bf16.gmra.mrb[0].mxu0 %v130
    %v183 = vpop.f32.mrb[0].mxu0
    %v184 = vadd.f32 0.0, %v183
    %v185 = vpop.f32.mrb[0].mxu0
    %v186 = vadd.f32 0.0, %v185
    %v187 = vpop.f32.mrb[0].mxu0
    %v188 = vadd.f32 0.0, %v187
    %v189 = vpop.f32.mrb[0].mxu0
    %v190 = vadd.f32 0.0, %v189
    %191 = vdwg.mxu0
    %v193 = vunpack.c.l.b16 %v118
    %v194 = vunpack.c.h.b16 %v118
    %v195 = vpack.c.b16 %v193, %v193
    %v196 = vpack.c.b16 %v194, %v194
    %v198 = vsel %vm125, %v95, 0
    %v201 = vsel %vm125, %v96, 0
    %v204 = vsel %vm132, %v195, 0
    %v207 = vsel %vm132, %v196, 0
    %209 = vmatprep.subr.bf16.mxu0 %v207
    %210 = vmatpush1.bf16.msra.mxu0 %v204
    %211 = vmatprep.subr.bf16.mxu0 0
    %212 = vmatpush1.bf16.msra.mxu0 0
    %213 = vmatprep.subr.bf16.mxu0 0
    %214 = vmatpush1.bf16.msra.mxu0 0
    %215 = vmatprep.subr.bf16.mxu0 0
    %216 = vmatpush1.bf16.msra.mxu0 0
    %217 = vmatprep.subr.bf16.mxu0 0
    %218 = vmatpush1.bf16.msra.mxu0 0
    %219 = vmatprep.subr.bf16.mxu0 0
    %220 = vmatpush1.bf16.msra.mxu0 0
    %221 = vmatprep.subr.bf16.mxu0 0
    %222 = vmatpush1.bf16.msra.mxu0 0
    %223 = vmatprep.subr.bf16.mxu0 0
    %224 = vmatpush1.bf16.msra.mxu0 0
    %225 = vmatprep.subr.bf16.mxu0 0
    %226 = vmatpush1.bf16.msra.mxu0 0
    %227 = vmatprep.subr.bf16.mxu0 0
    %228 = vmatpush1.bf16.msra.mxu0 0
    %229 = vmatprep.subr.bf16.mxu0 0
    %230 = vmatpush1.bf16.msra.mxu0 0
    %231 = vmatprep.subr.bf16.mxu0 0
    %232 = vmatpush1.bf16.msra.mxu0 0
    %233 = vmatprep.subr.bf16.mxu0 0
    %234 = vmatpush1.bf16.msra.mxu0 0
    %235 = vmatprep.subr.bf16.mxu0 0
    %236 = vmatpush1.bf16.msra.mxu0 0
    %237 = vmatprep.subr.bf16.mxu0 0
    %238 = vmatpush1.bf16.msra.mxu0 0
    %239 = vmatprep.subr.bf16.mxu0 0
    %240 = vmatpush1.bf16.msra.mxu0 0
    %241 = vmatprep.mubr.bf16.mxu0 0
    %242 = vmatmul.mubr.bf16.gmra.mrb[0].mxu0 %v198
    %v243 = vpop.f32.mrb[0].mxu0
    %v244 = vadd.f32 %v174, %v243
    %v245 = vpop.f32.mrb[0].mxu0
    %v246 = vadd.f32 %v176, %v245
    %v247 = vpop.f32.mrb[0].mxu0
    %v248 = vadd.f32 %v178, %v247
    %v249 = vpop.f32.mrb[0].mxu0
    %v250 = vadd.f32 %v180, %v249
    %251 = vmatprep.mubr.bf16.mxu0 0
    %252 = vmatmul.mubr.bf16.gmra.mrb[0].mxu0 %v201
    %v253 = vpop.f32.mrb[0].mxu0
    %v254 = vadd.f32 %v184, %v253
    %v255 = vpop.f32.mrb[0].mxu0
    %v256 = vadd.f32 %v186, %v255
    %v257 = vpop.f32.mrb[0].mxu0
    %v258 = vadd.f32 %v188, %v257
    %v259 = vpop.f32.mrb[0].mxu0
    %v260 = vadd.f32 %v190, %v259
    %261 = vdwg.mxu0
    %v263 = vlaneseq
    %v264 = vshrl.u32 %v263, 7
    %v265 = vsub.s32 0, %v264
    %v266 = vrot.slane %v107, %v265
    %v267 = vlaneseq
    %v268 = vshrl.u32 %v267, 7
    %v269 = vsub.s32 1, %v268
    %v270 = vrot.slane %v107, %v269
    %v273 = vadd.f32 %v244, %v266
    %v274 = vadd.f32 %v246, %v270
    %v275 = vadd.f32 %v248, %v266
    %v276 = vadd.f32 %v250, %v270
    %v277 = vadd.f32 %v254, %v266
    %v278 = vadd.f32 %v256, %v270
    %v279 = vadd.f32 %v258, %v266
    %v280 = vadd.f32 %v260, %v270
    %vm281 = vcmp.gt.f32.partialorder %v273, 0.0
    %vm282 = vcmp.gt.f32.partialorder %v274, 0.0
    %vm283 = vcmp.gt.f32.partialorder %v275, 0.0
    %vm284 = vcmp.gt.f32.partialorder %v276, 0.0
    %vm285 = vcmp.gt.f32.partialorder %v277, 0.0
    %vm286 = vcmp.gt.f32.partialorder %v278, 0.0
    %vm287 = vcmp.gt.f32.partialorder %v279, 0.0
    %vm288 = vcmp.gt.f32.partialorder %v280, 0.0
    %v289 = vmul.f32 %v273, 1.442695
    %v290 = vpow.pop %v289
    %v291 = vmul.f32 %v274, 1.442695
    %v292 = vpow.pop %v291
    %v293 = vmul.f32 %v275, 1.442695
    %v294 = vpow.pop %v293
    %v295 = vmul.f32 %v276, 1.442695
    %v296 = vpow.pop %v295
    %v297 = vmul.f32 %v277, 1.442695
    %v298 = vpow.pop %v297
    %v299 = vmul.f32 %v278, 1.442695
    %v300 = vpow.pop %v299
    %v301 = vmul.f32 %v279, 1.442695
    %v302 = vpow.pop %v301
    %v303 = vmul.f32 %v280, 1.442695
    %v304 = vpow.pop %v303
    %v305 = vsub.f32 %v290, 1.0
    %v306 = vsub.f32 %v292, 1.0
    %v307 = vsub.f32 %v294, 1.0
    %v308 = vsub.f32 %v296, 1.0
    %v309 = vsub.f32 %v298, 1.0
    %v310 = vsub.f32 %v300, 1.0
    %v311 = vsub.f32 %v302, 1.0
    %v312 = vsub.f32 %v304, 1.0
    %v313 = vsel %vm281, %v273, %v305
    %v314 = vsel %vm282, %v274, %v306
    %v315 = vsel %vm283, %v275, %v307
    %v316 = vsel %vm284, %v276, %v308
    %v317 = vsel %vm285, %v277, %v309
    %v318 = vsel %vm286, %v278, %v310
    %v319 = vsel %vm287, %v279, %v311
    %v320 = vsel %vm288, %v280, %v312
    %v321 = vpack.c.bf16 %v315, %v313
    %v322 = vpack.c.bf16 %v316, %v314
    %v323 = vpack.c.bf16 %v319, %v317
    %v324 = vpack.c.bf16 %v320, %v318
    %v325 = vld [vmem:[#allocation2] sm:$0xff]
    %v326 = vld [vmem:[#allocation2 + $0x8] sm:$0xff]
    %v327 = vld [vmem:[#allocation2 + $0x10] sm:$0xff]
    %v328 = vld [vmem:[#allocation2 + $0x18] sm:$0xff]
    %v329 = vld [vmem:[#allocation2 + $0x20] sm:$0xff]
    %v330 = vld [vmem:[#allocation2 + $0x28] sm:$0xff]
    %v331 = vld [vmem:[#allocation2 + $0x30] sm:$0xff]
    %v332 = vld [vmem:[#allocation2 + $0x38] sm:$0xff]
    %v333 = vld [vmem:[#allocation2 + $0x40] sm:$0xff]
    %v334 = vld [vmem:[#allocation2 + $0x48] sm:$0xff]
    %v335 = vld [vmem:[#allocation2 + $0x50] sm:$0xff]
    %v336 = vld [vmem:[#allocation2 + $0x58] sm:$0xff]
    %v337 = vld [vmem:[#allocation2 + $0x60] sm:$0xff]
    %v338 = vld [vmem:[#allocation2 + $0x68] sm:$0xff]
    %v339 = vld [vmem:[#allocation2 + $0x70] sm:$0xff]
    %v340 = vld [vmem:[#allocation2 + $0x78] sm:$0xff]
    %v341 = vld [vmem:[#allocation2 + $0x80] sm:$0xff]
    %v342 = vld [vmem:[#allocation2 + $0x88] sm:$0xff]
    %v343 = vld [vmem:[#allocation2 + $0x90] sm:$0xff]
    %v344 = vld [vmem:[#allocation2 + $0x98] sm:$0xff]
    %v345 = vld [vmem:[#allocation2 + $0xa0] sm:$0xff]
    %v346 = vld [vmem:[#allocation2 + $0xa8] sm:$0xff]
    %v347 = vld [vmem:[#allocation2 + $0xb0] sm:$0xff]
    %v348 = vld [vmem:[#allocation2 + $0xb8] sm:$0xff]
    %v349 = vld [vmem:[#allocation2 + $0xc0] sm:$0xff]
    %v350 = vld [vmem:[#allocation2 + $0xc8] sm:$0xff]
    %v351 = vld [vmem:[#allocation2 + $0xd0] sm:$0xff]
    %v352 = vld [vmem:[#allocation2 + $0xd8] sm:$0xff]
    %v353 = vld [vmem:[#allocation2 + $0xe0] sm:$0xff]
    %v354 = vld [vmem:[#allocation2 + $0xe8] sm:$0xff]
    %v355 = vld [vmem:[#allocation2 + $0xf0] sm:$0xff]
    %v356 = vld [vmem:[#allocation2 + $0xf8] sm:$0xff]
    %v358 = vlaneseq
    %v359 = vshrl.u32 %v358, 7
    %v360 = vsub.s32 0, %v359
    %v361 = vrot.slane %v109, %v360
    %v362 = vlaneseq
    %v363 = vshrl.u32 %v362, 7
    %v364 = vsub.s32 1, %v363
    %v365 = vrot.slane %v109, %v364
    %v400 = vunpack.c.l.b16 %v325
    %v401 = vunpack.c.h.b16 %v325
    %v402 = vunpack.c.l.b16 %v326
    %v403 = vunpack.c.h.b16 %v326
    %v404 = vunpack.c.l.b16 %v327
    %v405 = vunpack.c.h.b16 %v327
    %v406 = vunpack.c.l.b16 %v328
    %v407 = vunpack.c.h.b16 %v328
    %v408 = vunpack.c.l.b16 %v329
    %v409 = vunpack.c.h.b16 %v329
    %v410 = vunpack.c.l.b16 %v330
    %v411 = vunpack.c.h.b16 %v330
    %v412 = vunpack.c.l.b16 %v331
    %v413 = vunpack.c.h.b16 %v331
    %v414 = vunpack.c.l.b16 %v332
    %v415 = vunpack.c.h.b16 %v332
    %v416 = vunpack.c.l.b16 %v333
    %v417 = vunpack.c.h.b16 %v333
    %v418 = vunpack.c.l.b16 %v334
    %v419 = vunpack.c.h.b16 %v334
    %v420 = vunpack.c.l.b16 %v335
    %v421 = vunpack.c.h.b16 %v335
    %v422 = vunpack.c.l.b16 %v336
    %v423 = vunpack.c.h.b16 %v336
    %v424 = vunpack.c.l.b16 %v337
    %v425 = vunpack.c.h.b16 %v337
    %v426 = vunpack.c.l.b16 %v338
    %v427 = vunpack.c.h.b16 %v338
    %v428 = vunpack.c.l.b16 %v339
    %v429 = vunpack.c.h.b16 %v339
    %v430 = vunpack.c.l.b16 %v340
    %v431 = vunpack.c.h.b16 %v340
    %v432 = vunpack.c.l.b16 %v341
    %v433 = vunpack.c.h.b16 %v341
    %v434 = vunpack.c.l.b16 %v342
    %v435 = vunpack.c.h.b16 %v342
    %v436 = vunpack.c.l.b16 %v343
    %v437 = vunpack.c.h.b16 %v343
    %v438 = vunpack.c.l.b16 %v344
    %v439 = vunpack.c.h.b16 %v344
    %v440 = vunpack.c.l.b16 %v345
    %v441 = vunpack.c.h.b16 %v345
    %v442 = vunpack.c.l.b16 %v346
    %v443 = vunpack.c.h.b16 %v346
    %v444 = vunpack.c.l.b16 %v347
    %v445 = vunpack.c.h.b16 %v347
    %v446 = vunpack.c.l.b16 %v348
    %v447 = vunpack.c.h.b16 %v348
    %v448 = vunpack.c.l.b16 %v349
    %v449 = vunpack.c.h.b16 %v349
    %v450 = vunpack.c.l.b16 %v350
    %v451 = vunpack.c.h.b16 %v350
    %v452 = vunpack.c.l.b16 %v351
    %v453 = vunpack.c.h.b16 %v351
    %v454 = vunpack.c.l.b16 %v352
    %v455 = vunpack.c.h.b16 %v352
    %v456 = vunpack.c.l.b16 %v353
    %v457 = vunpack.c.h.b16 %v353
    %v458 = vunpack.c.l.b16 %v354
    %v459 = vunpack.c.h.b16 %v354
    %v460 = vunpack.c.l.b16 %v355
    %v461 = vunpack.c.h.b16 %v355
    %v462 = vunpack.c.l.b16 %v356
    %v463 = vunpack.c.h.b16 %v356
    %v464 = vpack.c.b16 %v402, %v400
    %v465 = vpack.c.b16 %v403, %v401
    %v466 = vpack.c.b16 %v406, %v404
    %v467 = vpack.c.b16 %v407, %v405
    %v468 = vpack.c.b16 %v410, %v408
    %v469 = vpack.c.b16 %v411, %v409
    %v470 = vpack.c.b16 %v414, %v412
    %v471 = vpack.c.b16 %v415, %v413
    %v472 = vpack.c.b16 %v418, %v416
    %v473 = vpack.c.b16 %v419, %v417
    %v474 = vpack.c.b16 %v422, %v420
    %v475 = vpack.c.b16 %v423, %v421
    %v476 = vpack.c.b16 %v426, %v424
    %v477 = vpack.c.b16 %v427, %v425
    %v478 = vpack.c.b16 %v430, %v428
    %v479 = vpack.c.b16 %v431, %v429
    %v480 = vpack.c.b16 %v434, %v432
    %v481 = vpack.c.b16 %v435, %v433
    %v482 = vpack.c.b16 %v438, %v436
    %v483 = vpack.c.b16 %v439, %v437
    %v484 = vpack.c.b16 %v442, %v440
    %v485 = vpack.c.b16 %v443, %v441
    %v486 = vpack.c.b16 %v446, %v444
    %v487 = vpack.c.b16 %v447, %v445
    %v488 = vpack.c.b16 %v450, %v448
    %v489 = vpack.c.b16 %v451, %v449
    %v490 = vpack.c.b16 %v454, %v452
    %v491 = vpack.c.b16 %v455, %v453
    %v492 = vpack.c.b16 %v458, %v456
    %v493 = vpack.c.b16 %v459, %v457
    %v494 = vpack.c.b16 %v462, %v460
    %v495 = vpack.c.b16 %v463, %v461
    %528 = vmatprep.subr.bf16.mxu0 %v465
    %529 = vmatpush1.bf16.msra.mxu0 %v464
    %530 = vmatprep.subr.bf16.mxu0 %v467
    %531 = vmatpush1.bf16.msra.mxu0 %v466
    %532 = vmatprep.subr.bf16.mxu0 %v469
    %533 = vmatpush1.bf16.msra.mxu0 %v468
    %534 = vmatprep.subr.bf16.mxu0 %v471
    %535 = vmatpush1.bf16.msra.mxu0 %v470
    %536 = vmatprep.subr.bf16.mxu0 %v473
    %537 = vmatpush1.bf16.msra.mxu0 %v472
    %538 = vmatprep.subr.bf16.mxu0 %v475
    %539 = vmatpush1.bf16.msra.mxu0 %v474
    %540 = vmatprep.subr.bf16.mxu0 %v477
    %541 = vmatpush1.bf16.msra.mxu0 %v476
    %542 = vmatprep.subr.bf16.mxu0 %v479
    %543 = vmatpush1.bf16.msra.mxu0 %v478
    %544 = vmatprep.subr.bf16.mxu0 %v481
    %545 = vmatpush1.bf16.msra.mxu0 %v480
    %546 = vmatprep.subr.bf16.mxu0 %v483
    %547 = vmatpush1.bf16.msra.mxu0 %v482
    %548 = vmatprep.subr.bf16.mxu0 %v485
    %549 = vmatpush1.bf16.msra.mxu0 %v484
    %550 = vmatprep.subr.bf16.mxu0 %v487
    %551 = vmatpush1.bf16.msra.mxu0 %v486
    %552 = vmatprep.subr.bf16.mxu0 %v489
    %553 = vmatpush1.bf16.msra.mxu0 %v488
    %554 = vmatprep.subr.bf16.mxu0 %v491
    %555 = vmatpush1.bf16.msra.mxu0 %v490
    %556 = vmatprep.subr.bf16.mxu0 %v493
    %557 = vmatpush1.bf16.msra.mxu0 %v492
    %558 = vmatprep.subr.bf16.mxu0 %v495
    %559 = vmatpush1.bf16.msra.mxu0 %v494
    %560 = vmatprep.mubr.bf16.mxu0 %v322
    %561 = vmatmul.mubr.bf16.gmra.mrb[0].mxu0 %v321
    %v562 = vpop.f32.mrb[0].mxu0
    %v563 = vadd.f32 %v361, %v562
    %v564 = vpop.f32.mrb[0].mxu0
    %v565 = vadd.f32 %v365, %v564
    %v566 = vpop.f32.mrb[0].mxu0
    %v567 = vadd.f32 %v361, %v566
    %v568 = vpop.f32.mrb[0].mxu0
    %v569 = vadd.f32 %v365, %v568
    %570 = vmatprep.mubr.bf16.mxu0 %v324
    %571 = vmatmul.mubr.bf16.gmra.mrb[0].mxu0 %v323
    %v572 = vpop.f32.mrb[0].mxu0
    %v573 = vadd.f32 %v361, %v572
    %v574 = vpop.f32.mrb[0].mxu0
    %v575 = vadd.f32 %v365, %v574
    %v576 = vpop.f32.mrb[0].mxu0
    %v577 = vadd.f32 %v361, %v576
    %v578 = vpop.f32.mrb[0].mxu0
    %v579 = vadd.f32 %v365, %v578
    %580 = vdwg.mxu0
    %v581 = vpack.c.bf16 %v567, %v563
    %v582 = vpack.c.bf16 %v569, %v565
    %v583 = vpack.c.bf16 %v577, %v573
    %v584 = vpack.c.bf16 %v579, %v575
    %v585 = vld [vmem:[#allocation4] sm:$0xff]
    %v586 = vld [vmem:[#allocation4 + $0x8] sm:$0xff]
    %v587 = vld [vmem:[#allocation4 + $0x10] sm:$0xff]
    %v588 = vld [vmem:[#allocation4 + $0x18] sm:$0xff]
    %v589 = vld [vmem:[#allocation4 + $0x20] sm:$0xff]
    %v590 = vld [vmem:[#allocation4 + $0x28] sm:$0xff]
    %v591 = vld [vmem:[#allocation4 + $0x30] sm:$0xff]
    %v592 = vld [vmem:[#allocation4 + $0x38] sm:$0xff]
    %v593 = vld [vmem:[#allocation4 + $0x40] sm:$0xff]
    %v594 = vld [vmem:[#allocation4 + $0x48] sm:$0xff]
    %v595 = vld [vmem:[#allocation4 + $0x50] sm:$0xff]
    %v596 = vld [vmem:[#allocation4 + $0x58] sm:$0xff]
    %v597 = vld [vmem:[#allocation4 + $0x60] sm:$0xff]
    %v598 = vld [vmem:[#allocation4 + $0x68] sm:$0xff]
    %v599 = vld [vmem:[#allocation4 + $0x70] sm:$0xff]
    %v600 = vld [vmem:[#allocation4 + $0x78] sm:$0xff]
    %v601 = vld [vmem:[#allocation4 + $0x80] sm:$0xff]
    %v602 = vld [vmem:[#allocation4 + $0x88] sm:$0xff]
    %v603 = vld [vmem:[#allocation4 + $0x90] sm:$0xff]
    %v604 = vld [vmem:[#allocation4 + $0x98] sm:$0xff]
    %v605 = vld [vmem:[#allocation4 + $0xa0] sm:$0xff]
    %v606 = vld [vmem:[#allocation4 + $0xa8] sm:$0xff]
    %v607 = vld [vmem:[#allocation4 + $0xb0] sm:$0xff]
    %v608 = vld [vmem:[#allocation4 + $0xb8] sm:$0xff]
    %v609 = vld [vmem:[#allocation4 + $0xc0] sm:$0xff]
    %v610 = vld [vmem:[#allocation4 + $0xc8] sm:$0xff]
    %v611 = vld [vmem:[#allocation4 + $0xd0] sm:$0xff]
    %v612 = vld [vmem:[#allocation4 + $0xd8] sm:$0xff]
    %v613 = vld [vmem:[#allocation4 + $0xe0] sm:$0xff]
    %v614 = vld [vmem:[#allocation4 + $0xe8] sm:$0xff]
    %v615 = vld [vmem:[#allocation4 + $0xf0] sm:$0xff]
    %v616 = vld [vmem:[#allocation4 + $0xf8] sm:$0xff]
    %618 = vset.pattern.permute.xlu0 0
    %619 = vperm.xlu0 %618, %v103
    %v620 = vpop.permute.xlu0 %619
    %623 = vset.pattern.permute.xlu0 0
    %624 = vperm.xlu0 %623, %v104
    %v625 = vpop.permute.xlu0 %624
    %628 = vset.pattern.permute.xlu0 0
    %629 = vperm.xlu0 %628, %v105
    %v630 = vpop.permute.xlu0 %629
    %633 = vset.pattern.permute.xlu0 0
    %634 = vperm.xlu0 %633, %v106
    %v635 = vpop.permute.xlu0 %634
    %v638 = vlaneseq
    %v639 = vshrl.u32 %v638, 7
    %v640 = vsub.s32 0, %v639
    %v641 = vrot.slane %v117, %v640
    %v642 = vlaneseq
    %v643 = vshrl.u32 %v642, 7
    %v644 = vsub.s32 1, %v643
    %v645 = vrot.slane %v117, %v644
    %v648 = vmul.f32 %v620, %v641
    %v649 = vmul.f32 %v620, %v645
    %v650 = vmul.f32 %v625, %v641
    %v651 = vmul.f32 %v625, %v645
    %v652 = vmul.f32 %v630, %v641
    %v653 = vmul.f32 %v630, %v645
    %v654 = vmul.f32 %v635, %v641
    %v655 = vmul.f32 %v635, %v645
    %v688 = vunpack.c.l.b16 %v585
    %v689 = vunpack.c.h.b16 %v585
    %v690 = vunpack.c.l.b16 %v586
    %v691 = vunpack.c.h.b16 %v586
    %v692 = vunpack.c.l.b16 %v587
    %v693 = vunpack.c.h.b16 %v587
    %v694 = vunpack.c.l.b16 %v588
    %v695 = vunpack.c.h.b16 %v588
    %v696 = vunpack.c.l.b16 %v589
    %v697 = vunpack.c.h.b16 %v589
    %v698 = vunpack.c.l.b16 %v590
    %v699 = vunpack.c.h.b16 %v590
    %v700 = vunpack.c.l.b16 %v591
    %v701 = vunpack.c.h.b16 %v591
    %v702 = vunpack.c.l.b16 %v592
    %v703 = vunpack.c.h.b16 %v592
    %v704 = vunpack.c.l.b16 %v593
    %v705 = vunpack.c.h.b16 %v593
    %v706 = vunpack.c.l.b16 %v594
    %v707 = vunpack.c.h.b16 %v594
    %v708 = vunpack.c.l.b16 %v595
    %v709 = vunpack.c.h.b16 %v595
    %v710 = vunpack.c.l.b16 %v596
    %v711 = vunpack.c.h.b16 %v596
    %v712 = vunpack.c.l.b16 %v597
    %v713 = vunpack.c.h.b16 %v597
    %v714 = vunpack.c.l.b16 %v598
    %v715 = vunpack.c.h.b16 %v598
    %v716 = vunpack.c.l.b16 %v599
    %v717 = vunpack.c.h.b16 %v599
    %v718 = vunpack.c.l.b16 %v600
    %v719 = vunpack.c.h.b16 %v600
    %v720 = vunpack.c.l.b16 %v601
    %v721 = vunpack.c.h.b16 %v601
    %v722 = vunpack.c.l.b16 %v602
    %v723 = vunpack.c.h.b16 %v602
    %v724 = vunpack.c.l.b16 %v603
    %v725 = vunpack.c.h.b16 %v603
    %v726 = vunpack.c.l.b16 %v604
    %v727 = vunpack.c.h.b16 %v604
    %v728 = vunpack.c.l.b16 %v605
    %v729 = vunpack.c.h.b16 %v605
    %v730 = vunpack.c.l.b16 %v606
    %v731 = vunpack.c.h.b16 %v606
    %v732 = vunpack.c.l.b16 %v607
    %v733 = vunpack.c.h.b16 %v607
    %v734 = vunpack.c.l.b16 %v608
    %v735 = vunpack.c.h.b16 %v608
    %v736 = vunpack.c.l.b16 %v609
    %v737 = vunpack.c.h.b16 %v609
    %v738 = vunpack.c.l.b16 %v610
    %v739 = vunpack.c.h.b16 %v610
    %v740 = vunpack.c.l.b16 %v611
    %v741 = vunpack.c.h.b16 %v611
    %v742 = vunpack.c.l.b16 %v612
    %v743 = vunpack.c.h.b16 %v612
    %v744 = vunpack.c.l.b16 %v613
    %v745 = vunpack.c.h.b16 %v613
    %v746 = vunpack.c.l.b16 %v614
    %v747 = vunpack.c.h.b16 %v614
    %v748 = vunpack.c.l.b16 %v615
    %v749 = vunpack.c.h.b16 %v615
    %v750 = vunpack.c.l.b16 %v616
    %v751 = vunpack.c.h.b16 %v616
    %v752 = vpack.c.b16 %v690, %v688
    %v753 = vpack.c.b16 %v691, %v689
    %v754 = vpack.c.b16 %v694, %v692
    %v755 = vpack.c.b16 %v695, %v693
    %v756 = vpack.c.b16 %v698, %v696
    %v757 = vpack.c.b16 %v699, %v697
    %v758 = vpack.c.b16 %v702, %v700
    %v759 = vpack.c.b16 %v703, %v701
    %v760 = vpack.c.b16 %v706, %v704
    %v761 = vpack.c.b16 %v707, %v705
    %v762 = vpack.c.b16 %v710, %v708
    %v763 = vpack.c.b16 %v711, %v709
    %v764 = vpack.c.b16 %v714, %v712
    %v765 = vpack.c.b16 %v715, %v713
    %v766 = vpack.c.b16 %v718, %v716
    %v767 = vpack.c.b16 %v719, %v717
    %v768 = vpack.c.b16 %v722, %v720
    %v769 = vpack.c.b16 %v723, %v721
    %v770 = vpack.c.b16 %v726, %v724
    %v771 = vpack.c.b16 %v727, %v725
    %v772 = vpack.c.b16 %v730, %v728
    %v773 = vpack.c.b16 %v731, %v729
    %v774 = vpack.c.b16 %v734, %v732
    %v775 = vpack.c.b16 %v735, %v733
    %v776 = vpack.c.b16 %v738, %v736
    %v777 = vpack.c.b16 %v739, %v737
    %v778 = vpack.c.b16 %v742, %v740
    %v779 = vpack.c.b16 %v743, %v741
    %v780 = vpack.c.b16 %v746, %v744
    %v781 = vpack.c.b16 %v747, %v745
    %v782 = vpack.c.b16 %v750, %v748
    %v783 = vpack.c.b16 %v751, %v749
    %816 = vmatprep.subr.bf16.mxu0 %v753
    %817 = vmatpush1.bf16.msra.mxu0 %v752
    %818 = vmatprep.subr.bf16.mxu0 %v755
    %819 = vmatpush1.bf16.msra.mxu0 %v754
    %820 = vmatprep.subr.bf16.mxu0 %v757
    %821 = vmatpush1.bf16.msra.mxu0 %v756
    %822 = vmatprep.subr.bf16.mxu0 %v759
    %823 = vmatpush1.bf16.msra.mxu0 %v758
    %824 = vmatprep.subr.bf16.mxu0 %v761
    %825 = vmatpush1.bf16.msra.mxu0 %v760
    %826 = vmatprep.subr.bf16.mxu0 %v763
    %827 = vmatpush1.bf16.msra.mxu0 %v762
    %828 = vmatprep.subr.bf16.mxu0 %v765
    %829 = vmatpush1.bf16.msra.mxu0 %v764
    %830 = vmatprep.subr.bf16.mxu0 %v767
    %831 = vmatpush1.bf16.msra.mxu0 %v766
    %832 = vmatprep.subr.bf16.mxu0 %v769
    %833 = vmatpush1.bf16.msra.mxu0 %v768
    %834 = vmatprep.subr.bf16.mxu0 %v771
    %835 = vmatpush1.bf16.msra.mxu0 %v770
    %836 = vmatprep.subr.bf16.mxu0 %v773
    %837 = vmatpush1.bf16.msra.mxu0 %v772
    %838 = vmatprep.subr.bf16.mxu0 %v775
    %839 = vmatpush1.bf16.msra.mxu0 %v774
    %840 = vmatprep.subr.bf16.mxu0 %v777
    %841 = vmatpush1.bf16.msra.mxu0 %v776
    %842 = vmatprep.subr.bf16.mxu0 %v779
    %843 = vmatpush1.bf16.msra.mxu0 %v778
    %844 = vmatprep.subr.bf16.mxu0 %v781
    %845 = vmatpush1.bf16.msra.mxu0 %v780
    %846 = vmatprep.subr.bf16.mxu0 %v783
    %847 = vmatpush1.bf16.msra.mxu0 %v782
    %848 = vmatprep.mubr.bf16.mxu0 %v582
    %849 = vmatmul.mubr.bf16.gmra.mrb[0].mxu0 %v581
    %v850 = vpop.f32.mrb[0].mxu0
    %v851 = vadd.f32 %v648, %v850
    %v852 = vpop.f32.mrb[0].mxu0
    %v853 = vadd.f32 %v649, %v852
    %v854 = vpop.f32.mrb[0].mxu0
    %v855 = vadd.f32 %v650, %v854
    %v856 = vpop.f32.mrb[0].mxu0
    %v857 = vadd.f32 %v651, %v856
    %858 = vmatprep.mubr.bf16.mxu0 %v584
    %859 = vmatmul.mubr.bf16.gmra.mrb[0].mxu0 %v583
    %v860 = vpop.f32.mrb[0].mxu0
    %v861 = vadd.f32 %v652, %v860
    %v862 = vpop.f32.mrb[0].mxu0
    %v863 = vadd.f32 %v653, %v862
    %v864 = vpop.f32.mrb[0].mxu0
    %v865 = vadd.f32 %v654, %v864
    %v866 = vpop.f32.mrb[0].mxu0
    %v867 = vadd.f32 %v655, %v866
    %868 = vdwg.mxu0
    %v870 = vlaneseq
    %v871 = vshrl.u32 %v870, 7
    %v872 = vsub.s32 0, %v871
    %v873 = vrot.slane %v111, %v872
    %v874 = vlaneseq
    %v875 = vshrl.u32 %v874, 7
    %v876 = vsub.s32 1, %v875
    %v877 = vrot.slane %v111, %v876
    %v880 = vadd.f32 %v851, %v873
    %v881 = vadd.f32 %v853, %v877
    %v882 = vadd.f32 %v855, %v873
    %v883 = vadd.f32 %v857, %v877
    %v884 = vadd.f32 %v861, %v873
    %v885 = vadd.f32 %v863, %v877
    %v886 = vadd.f32 %v865, %v873
    %v887 = vadd.f32 %v867, %v877
    %vm888 = vcmp.gt.f32.partialorder %v880, 0.0
    %vm889 = vcmp.gt.f32.partialorder %v881, 0.0
    %vm890 = vcmp.gt.f32.partialorder %v882, 0.0
    %vm891 = vcmp.gt.f32.partialorder %v883, 0.0
    %vm892 = vcmp.gt.f32.partialorder %v884, 0.0
    %vm893 = vcmp.gt.f32.partialorder %v885, 0.0
    %vm894 = vcmp.gt.f32.partialorder %v886, 0.0
    %vm895 = vcmp.gt.f32.partialorder %v887, 0.0
    %v896 = vmul.f32 %v880, 1.442695
    %v897 = vpow.pop %v896
    %v898 = vmul.f32 %v881, 1.442695
    %v899 = vpow.pop %v898
    %v900 = vmul.f32 %v882, 1.442695
    %v901 = vpow.pop %v900
    %v902 = vmul.f32 %v883, 1.442695
    %v903 = vpow.pop %v902
    %v904 = vmul.f32 %v884, 1.442695
    %v905 = vpow.pop %v904
    %v906 = vmul.f32 %v885, 1.442695
    %v907 = vpow.pop %v906
    %v908 = vmul.f32 %v886, 1.442695
    %v909 = vpow.pop %v908
    %v910 = vmul.f32 %v887, 1.442695
    %v911 = vpow.pop %v910
    %v912 = vsub.f32 %v897, 1.0
    %v913 = vsub.f32 %v899, 1.0
    %v914 = vsub.f32 %v901, 1.0
    %v915 = vsub.f32 %v903, 1.0
    %v916 = vsub.f32 %v905, 1.0
    %v917 = vsub.f32 %v907, 1.0
    %v918 = vsub.f32 %v909, 1.0
    %v919 = vsub.f32 %v911, 1.0
    %v920 = vsel %vm888, %v880, %v912
    %v921 = vsel %vm889, %v881, %v913
    %v922 = vsel %vm890, %v882, %v914
    %v923 = vsel %vm891, %v883, %v915
    %v924 = vsel %vm892, %v884, %v916
    %v925 = vsel %vm893, %v885, %v917
    %v926 = vsel %vm894, %v886, %v918
    %v927 = vsel %vm895, %v887, %v919
    %v928 = vpack.c.bf16 %v922, %v920
    %v929 = vpack.c.bf16 %v923, %v921
    %v930 = vpack.c.bf16 %v926, %v924
    %v931 = vpack.c.bf16 %v927, %v925
    %v932 = vld [vmem:[#allocation6] sm:$0xff]
    %v933 = vld [vmem:[#allocation6 + $0x8] sm:$0xff]
    %v934 = vld [vmem:[#allocation6 + $0x10] sm:$0xff]
    %v935 = vld [vmem:[#allocation6 + $0x18] sm:$0xff]
    %v936 = vld [vmem:[#allocation6 + $0x20] sm:$0xff]
    %v937 = vld [vmem:[#allocation6 + $0x28] sm:$0xff]
    %v938 = vld [vmem:[#allocation6 + $0x30] sm:$0xff]
    %v939 = vld [vmem:[#allocation6 + $0x38] sm:$0xff]
    %v940 = vld [vmem:[#allocation6 + $0x40] sm:$0xff]
    %v941 = vld [vmem:[#allocation6 + $0x48] sm:$0xff]
    %v942 = vld [vmem:[#allocation6 + $0x50] sm:$0xff]
    %v943 = vld [vmem:[#allocation6 + $0x58] sm:$0xff]
    %v944 = vld [vmem:[#allocation6 + $0x60] sm:$0xff]
    %v945 = vld [vmem:[#allocation6 + $0x68] sm:$0xff]
    %v946 = vld [vmem:[#allocation6 + $0x70] sm:$0xff]
    %v947 = vld [vmem:[#allocation6 + $0x78] sm:$0xff]
    %v948 = vld [vmem:[#allocation6 + $0x80] sm:$0xff]
    %v949 = vld [vmem:[#allocation6 + $0x88] sm:$0xff]
    %v950 = vld [vmem:[#allocation6 + $0x90] sm:$0xff]
    %v951 = vld [vmem:[#allocation6 + $0x98] sm:$0xff]
    %v952 = vld [vmem:[#allocation6 + $0xa0] sm:$0xff]
    %v953 = vld [vmem:[#allocation6 + $0xa8] sm:$0xff]
    %v954 = vld [vmem:[#allocation6 + $0xb0] sm:$0xff]
    %v955 = vld [vmem:[#allocation6 + $0xb8] sm:$0xff]
    %v956 = vld [vmem:[#allocation6 + $0xc0] sm:$0xff]
    %v957 = vld [vmem:[#allocation6 + $0xc8] sm:$0xff]
    %v958 = vld [vmem:[#allocation6 + $0xd0] sm:$0xff]
    %v959 = vld [vmem:[#allocation6 + $0xd8] sm:$0xff]
    %v960 = vld [vmem:[#allocation6 + $0xe0] sm:$0xff]
    %v961 = vld [vmem:[#allocation6 + $0xe8] sm:$0xff]
    %v962 = vld [vmem:[#allocation6 + $0xf0] sm:$0xff]
    %v963 = vld [vmem:[#allocation6 + $0xf8] sm:$0xff]
    %v965 = vlaneseq
    %v966 = vshrl.u32 %v965, 7
    %v967 = vsub.s32 0, %v966
    %v968 = vrot.slane %v113, %v967
    %v969 = vlaneseq
    %v970 = vshrl.u32 %v969, 7
    %v971 = vsub.s32 1, %v970
    %v972 = vrot.slane %v113, %v971
    %v1007 = vunpack.c.l.b16 %v932
    %v1008 = vunpack.c.h.b16 %v932
    %v1009 = vunpack.c.l.b16 %v933
    %v1010 = vunpack.c.h.b16 %v933
    %v1011 = vunpack.c.l.b16 %v934
    %v1012 = vunpack.c.h.b16 %v934
    %v1013 = vunpack.c.l.b16 %v935
    %v1014 = vunpack.c.h.b16 %v935
    %v1015 = vunpack.c.l.b16 %v936
    %v1016 = vunpack.c.h.b16 %v936
    %v1017 = vunpack.c.l.b16 %v937
    %v1018 = vunpack.c.h.b16 %v937
    %v1019 = vunpack.c.l.b16 %v938
    %v1020 = vunpack.c.h.b16 %v938
    %v1021 = vunpack.c.l.b16 %v939
    %v1022 = vunpack.c.h.b16 %v939
    %v1023 = vunpack.c.l.b16 %v940
    %v1024 = vunpack.c.h.b16 %v940
    %v1025 = vunpack.c.l.b16 %v941
    %v1026 = vunpack.c.h.b16 %v941
    %v1027 = vunpack.c.l.b16 %v942
    %v1028 = vunpack.c.h.b16 %v942
    %v1029 = vunpack.c.l.b16 %v943
    %v1030 = vunpack.c.h.b16 %v943
    %v1031 = vunpack.c.l.b16 %v944
    %v1032 = vunpack.c.h.b16 %v944
    %v1033 = vunpack.c.l.b16 %v945
    %v1034 = vunpack.c.h.b16 %v945
    %v1035 = vunpack.c.l.b16 %v946
    %v1036 = vunpack.c.h.b16 %v946
    %v1037 = vunpack.c.l.b16 %v947
    %v1038 = vunpack.c.h.b16 %v947
    %v1039 = vunpack.c.l.b16 %v948
    %v1040 = vunpack.c.h.b16 %v948
    %v1041 = vunpack.c.l.b16 %v949
    %v1042 = vunpack.c.h.b16 %v949
    %v1043 = vunpack.c.l.b16 %v950
    %v1044 = vunpack.c.h.b16 %v950
    %v1045 = vunpack.c.l.b16 %v951
    %v1046 = vunpack.c.h.b16 %v951
    %v1047 = vunpack.c.l.b16 %v952
    %v1048 = vunpack.c.h.b16 %v952
    %v1049 = vunpack.c.l.b16 %v953
    %v1050 = vunpack.c.h.b16 %v953
    %v1051 = vunpack.c.l.b16 %v954
    %v1052 = vunpack.c.h.b16 %v954
    %v1053 = vunpack.c.l.b16 %v955
    %v1054 = vunpack.c.h.b16 %v955
    %v1055 = vunpack.c.l.b16 %v956
    %v1056 = vunpack.c.h.b16 %v956
    %v1057 = vunpack.c.l.b16 %v957
    %v1058 = vunpack.c.h.b16 %v957
    %v1059 = vunpack.c.l.b16 %v958
    %v1060 = vunpack.c.h.b16 %v958
    %v1061 = vunpack.c.l.b16 %v959
    %v1062 = vunpack.c.h.b16 %v959
    %v1063 = vunpack.c.l.b16 %v960
    %v1064 = vunpack.c.h.b16 %v960
    %v1065 = vunpack.c.l.b16 %v961
    %v1066 = vunpack.c.h.b16 %v961
    %v1067 = vunpack.c.l.b16 %v962
    %v1068 = vunpack.c.h.b16 %v962
    %v1069 = vunpack.c.l.b16 %v963
    %v1070 = vunpack.c.h.b16 %v963
    %v1071 = vpack.c.b16 %v1009, %v1007
    %v1072 = vpack.c.b16 %v1010, %v1008
    %v1073 = vpack.c.b16 %v1013, %v1011
    %v1074 = vpack.c.b16 %v1014, %v1012
    %v1075 = vpack.c.b16 %v1017, %v1015
    %v1076 = vpack.c.b16 %v1018, %v1016
    %v1077 = vpack.c.b16 %v1021, %v1019
    %v1078 = vpack.c.b16 %v1022, %v1020
    %v1079 = vpack.c.b16 %v1025, %v1023
    %v1080 = vpack.c.b16 %v1026, %v1024
    %v1081 = vpack.c.b16 %v1029, %v1027
    %v1082 = vpack.c.b16 %v1030, %v1028
    %v1083 = vpack.c.b16 %v1033, %v1031
    %v1084 = vpack.c.b16 %v1034, %v1032
    %v1085 = vpack.c.b16 %v1037, %v1035
    %v1086 = vpack.c.b16 %v1038, %v1036
    %v1087 = vpack.c.b16 %v1041, %v1039
    %v1088 = vpack.c.b16 %v1042, %v1040
    %v1089 = vpack.c.b16 %v1045, %v1043
    %v1090 = vpack.c.b16 %v1046, %v1044
    %v1091 = vpack.c.b16 %v1049, %v1047
    %v1092 = vpack.c.b16 %v1050, %v1048
    %v1093 = vpack.c.b16 %v1053, %v1051
    %v1094 = vpack.c.b16 %v1054, %v1052
    %v1095 = vpack.c.b16 %v1057, %v1055
    %v1096 = vpack.c.b16 %v1058, %v1056
    %v1097 = vpack.c.b16 %v1061, %v1059
    %v1098 = vpack.c.b16 %v1062, %v1060
    %v1099 = vpack.c.b16 %v1065, %v1063
    %v1100 = vpack.c.b16 %v1066, %v1064
    %v1101 = vpack.c.b16 %v1069, %v1067
    %v1102 = vpack.c.b16 %v1070, %v1068
    %1135 = vmatprep.subr.bf16.mxu0 %v1072
    %1136 = vmatpush1.bf16.msra.mxu0 %v1071
    %1137 = vmatprep.subr.bf16.mxu0 %v1074
    %1138 = vmatpush1.bf16.msra.mxu0 %v1073
    %1139 = vmatprep.subr.bf16.mxu0 %v1076
    %1140 = vmatpush1.bf16.msra.mxu0 %v1075
    %1141 = vmatprep.subr.bf16.mxu0 %v1078
    %1142 = vmatpush1.bf16.msra.mxu0 %v1077
    %1143 = vmatprep.subr.bf16.mxu0 %v1080
    %1144 = vmatpush1.bf16.msra.mxu0 %v1079
    %1145 = vmatprep.subr.bf16.mxu0 %v1082
    %1146 = vmatpush1.bf16.msra.mxu0 %v1081
    %1147 = vmatprep.subr.bf16.mxu0 %v1084
    %1148 = vmatpush1.bf16.msra.mxu0 %v1083
    %1149 = vmatprep.subr.bf16.mxu0 %v1086
    %1150 = vmatpush1.bf16.msra.mxu0 %v1085
    %1151 = vmatprep.subr.bf16.mxu0 %v1088
    %1152 = vmatpush1.bf16.msra.mxu0 %v1087
    %1153 = vmatprep.subr.bf16.mxu0 %v1090
    %1154 = vmatpush1.bf16.msra.mxu0 %v1089
    %1155 = vmatprep.subr.bf16.mxu0 %v1092
    %1156 = vmatpush1.bf16.msra.mxu0 %v1091
    %1157 = vmatprep.subr.bf16.mxu0 %v1094
    %1158 = vmatpush1.bf16.msra.mxu0 %v1093
    %1159 = vmatprep.subr.bf16.mxu0 %v1096
    %1160 = vmatpush1.bf16.msra.mxu0 %v1095
    %1161 = vmatprep.subr.bf16.mxu0 %v1098
    %1162 = vmatpush1.bf16.msra.mxu0 %v1097
    %1163 = vmatprep.subr.bf16.mxu0 %v1100
    %1164 = vmatpush1.bf16.msra.mxu0 %v1099
    %1165 = vmatprep.subr.bf16.mxu0 %v1102
    %1166 = vmatpush1.bf16.msra.mxu0 %v1101
    %1167 = vmatprep.mubr.bf16.mxu0 %v929
    %1168 = vmatmul.mubr.bf16.gmra.mrb[0].mxu0 %v928
    %v1169 = vpop.f32.mrb[0].mxu0
    %v1170 = vadd.f32 %v968, %v1169
    %v1171 = vpop.f32.mrb[0].mxu0
    %v1172 = vadd.f32 %v972, %v1171
    %v1173 = vpop.f32.mrb[0].mxu0
    %v1174 = vadd.f32 %v968, %v1173
    %v1175 = vpop.f32.mrb[0].mxu0
    %v1176 = vadd.f32 %v972, %v1175
    %1177 = vmatprep.mubr.bf16.mxu0 %v931
    %1178 = vmatmul.mubr.bf16.gmra.mrb[0].mxu0 %v930
    %v1179 = vpop.f32.mrb[0].mxu0
    %v1180 = vadd.f32 %v968, %v1179
    %v1181 = vpop.f32.mrb[0].mxu0
    %v1182 = vadd.f32 %v972, %v1181
    %v1183 = vpop.f32.mrb[0].mxu0
    %v1184 = vadd.f32 %v968, %v1183
    %v1185 = vpop.f32.mrb[0].mxu0
    %v1186 = vadd.f32 %v972, %v1185
    %1187 = vdwg.mxu0
    %vm1188 = vcmp.gt.f32.partialorder %v1170, 0.0
    %vm1189 = vcmp.gt.f32.partialorder %v1172, 0.0
    %vm1190 = vcmp.gt.f32.partialorder %v1174, 0.0
    %vm1191 = vcmp.gt.f32.partialorder %v1176, 0.0
    %vm1192 = vcmp.gt.f32.partialorder %v1180, 0.0
    %vm1193 = vcmp.gt.f32.partialorder %v1182, 0.0
    %vm1194 = vcmp.gt.f32.partialorder %v1184, 0.0
    %vm1195 = vcmp.gt.f32.partialorder %v1186, 0.0
    %v1196 = vmul.f32 %v1170, 1.442695
    %v1197 = vpow.pop %v1196
    %v1198 = vmul.f32 %v1172, 1.442695
    %v1199 = vpow.pop %v1198
    %v1200 = vmul.f32 %v1174, 1.442695
    %v1201 = vpow.pop %v1200
    %v1202 = vmul.f32 %v1176, 1.442695
    %v1203 = vpow.pop %v1202
    %v1204 = vmul.f32 %v1180, 1.442695
    %v1205 = vpow.pop %v1204
    %v1206 = vmul.f32 %v1182, 1.442695
    %v1207 = vpow.pop %v1206
    %v1208 = vmul.f32 %v1184, 1.442695
    %v1209 = vpow.pop %v1208
    %v1210 = vmul.f32 %v1186, 1.442695
    %v1211 = vpow.pop %v1210
    %v1212 = vsub.f32 %v1197, 1.0
    %v1213 = vsub.f32 %v1199, 1.0
    %v1214 = vsub.f32 %v1201, 1.0
    %v1215 = vsub.f32 %v1203, 1.0
    %v1216 = vsub.f32 %v1205, 1.0
    %v1217 = vsub.f32 %v1207, 1.0
    %v1218 = vsub.f32 %v1209, 1.0
    %v1219 = vsub.f32 %v1211, 1.0
    %v1220 = vsel %vm1188, %v1170, %v1212
    %v1221 = vsel %vm1189, %v1172, %v1213
    %v1222 = vsel %vm1190, %v1174, %v1214
    %v1223 = vsel %vm1191, %v1176, %v1215
    %v1224 = vsel %vm1192, %v1180, %v1216
    %v1225 = vsel %vm1193, %v1182, %v1217
    %v1226 = vsel %vm1194, %v1184, %v1218
    %v1227 = vsel %vm1195, %v1186, %v1219
    %v1228 = vpack.c.bf16 %v1222, %v1220
    %v1229 = vpack.c.bf16 %v1223, %v1221
    %v1230 = vpack.c.bf16 %v1226, %v1224
    %v1231 = vpack.c.bf16 %v1227, %v1225
    %v1232 = vld [vmem:[#allocation7] sm:$0xff]
    %v1233 = vld [vmem:[#allocation7 + $0x8] sm:$0xff]
    %v1234 = vld [vmem:[#allocation7 + $0x10] sm:$0xff]
    %v1235 = vld [vmem:[#allocation7 + $0x18] sm:$0xff]
    %v1236 = vld [vmem:[#allocation7 + $0x20] sm:$0xff]
    %v1237 = vld [vmem:[#allocation7 + $0x28] sm:$0xff]
    %v1238 = vld [vmem:[#allocation7 + $0x30] sm:$0xff]
    %v1239 = vld [vmem:[#allocation7 + $0x38] sm:$0xff]
    %v1240 = vld [vmem:[#allocation7 + $0x40] sm:$0xff]
    %v1241 = vld [vmem:[#allocation7 + $0x48] sm:$0xff]
    %v1242 = vld [vmem:[#allocation7 + $0x50] sm:$0xff]
    %v1243 = vld [vmem:[#allocation7 + $0x58] sm:$0xff]
    %v1244 = vld [vmem:[#allocation7 + $0x60] sm:$0xff]
    %v1245 = vld [vmem:[#allocation7 + $0x68] sm:$0xff]
    %v1246 = vld [vmem:[#allocation7 + $0x70] sm:$0xff]
    %v1247 = vld [vmem:[#allocation7 + $0x78] sm:$0xff]
    %v1248 = vld [vmem:[#allocation7 + $0x80] sm:$0xff]
    %v1249 = vld [vmem:[#allocation7 + $0x88] sm:$0xff]
    %v1250 = vld [vmem:[#allocation7 + $0x90] sm:$0xff]
    %v1251 = vld [vmem:[#allocation7 + $0x98] sm:$0xff]
    %v1252 = vld [vmem:[#allocation7 + $0xa0] sm:$0xff]
    %v1253 = vld [vmem:[#allocation7 + $0xa8] sm:$0xff]
    %v1254 = vld [vmem:[#allocation7 + $0xb0] sm:$0xff]
    %v1255 = vld [vmem:[#allocation7 + $0xb8] sm:$0xff]
    %v1256 = vld [vmem:[#allocation7 + $0xc0] sm:$0xff]
    %v1257 = vld [vmem:[#allocation7 + $0xc8] sm:$0xff]
    %v1258 = vld [vmem:[#allocation7 + $0xd0] sm:$0xff]
    %v1259 = vld [vmem:[#allocation7 + $0xd8] sm:$0xff]
    %v1260 = vld [vmem:[#allocation7 + $0xe0] sm:$0xff]
    %v1261 = vld [vmem:[#allocation7 + $0xe8] sm:$0xff]
    %v1262 = vld [vmem:[#allocation7 + $0xf0] sm:$0xff]
    %v1263 = vld [vmem:[#allocation7 + $0xf8] sm:$0xff]
    %v1265 = vlaneseq
    %v1266 = vshrl.u32 %v1265, 7
    %v1267 = vsub.s32 0, %v1266
    %v1268 = vrot.slane %v115, %v1267
    %v1269 = vlaneseq
    %v1270 = vshrl.u32 %v1269, 7
    %v1271 = vsub.s32 1, %v1270
    %v1272 = vrot.slane %v115, %v1271
    %v1307 = vunpack.c.l.b16 %v1232
    %v1308 = vunpack.c.h.b16 %v1232
    %v1309 = vunpack.c.l.b16 %v1233
    %v1310 = vunpack.c.h.b16 %v1233
    %v1311 = vunpack.c.l.b16 %v1234
    %v1312 = vunpack.c.h.b16 %v1234
    %v1313 = vunpack.c.l.b16 %v1235
    %v1314 = vunpack.c.h.b16 %v1235
    %v1315 = vunpack.c.l.b16 %v1236
    %v1316 = vunpack.c.h.b16 %v1236
    %v1317 = vunpack.c.l.b16 %v1237
    %v1318 = vunpack.c.h.b16 %v1237
    %v1319 = vunpack.c.l.b16 %v1238
    %v1320 = vunpack.c.h.b16 %v1238
    %v1321 = vunpack.c.l.b16 %v1239
    %v1322 = vunpack.c.h.b16 %v1239
    %v1323 = vunpack.c.l.b16 %v1240
    %v1324 = vunpack.c.h.b16 %v1240
    %v1325 = vunpack.c.l.b16 %v1241
    %v1326 = vunpack.c.h.b16 %v1241
    %v1327 = vunpack.c.l.b16 %v1242
    %v1328 = vunpack.c.h.b16 %v1242
    %v1329 = vunpack.c.l.b16 %v1243
    %v1330 = vunpack.c.h.b16 %v1243
    %v1331 = vunpack.c.l.b16 %v1244
    %v1332 = vunpack.c.h.b16 %v1244
    %v1333 = vunpack.c.l.b16 %v1245
    %v1334 = vunpack.c.h.b16 %v1245
    %v1335 = vunpack.c.l.b16 %v1246
    %v1336 = vunpack.c.h.b16 %v1246
    %v1337 = vunpack.c.l.b16 %v1247
    %v1338 = vunpack.c.h.b16 %v1247
    %v1339 = vunpack.c.l.b16 %v1248
    %v1340 = vunpack.c.h.b16 %v1248
    %v1341 = vunpack.c.l.b16 %v1249
    %v1342 = vunpack.c.h.b16 %v1249
    %v1343 = vunpack.c.l.b16 %v1250
    %v1344 = vunpack.c.h.b16 %v1250
    %v1345 = vunpack.c.l.b16 %v1251
    %v1346 = vunpack.c.h.b16 %v1251
    %v1347 = vunpack.c.l.b16 %v1252
    %v1348 = vunpack.c.h.b16 %v1252
    %v1349 = vunpack.c.l.b16 %v1253
    %v1350 = vunpack.c.h.b16 %v1253
    %v1351 = vunpack.c.l.b16 %v1254
    %v1352 = vunpack.c.h.b16 %v1254
    %v1353 = vunpack.c.l.b16 %v1255
    %v1354 = vunpack.c.h.b16 %v1255
    %v1355 = vunpack.c.l.b16 %v1256
    %v1356 = vunpack.c.h.b16 %v1256
    %v1357 = vunpack.c.l.b16 %v1257
    %v1358 = vunpack.c.h.b16 %v1257
    %v1359 = vunpack.c.l.b16 %v1258
    %v1360 = vunpack.c.h.b16 %v1258
    %v1361 = vunpack.c.l.b16 %v1259
    %v1362 = vunpack.c.h.b16 %v1259
    %v1363 = vunpack.c.l.b16 %v1260
    %v1364 = vunpack.c.h.b16 %v1260
    %v1365 = vunpack.c.l.b16 %v1261
    %v1366 = vunpack.c.h.b16 %v1261
    %v1367 = vunpack.c.l.b16 %v1262
    %v1368 = vunpack.c.h.b16 %v1262
    %v1369 = vunpack.c.l.b16 %v1263
    %v1370 = vunpack.c.h.b16 %v1263
    %v1371 = vpack.c.b16 %v1309, %v1307
    %v1372 = vpack.c.b16 %v1310, %v1308
    %v1373 = vpack.c.b16 %v1313, %v1311
    %v1374 = vpack.c.b16 %v1314, %v1312
    %v1375 = vpack.c.b16 %v1317, %v1315
    %v1376 = vpack.c.b16 %v1318, %v1316
    %v1377 = vpack.c.b16 %v1321, %v1319
    %v1378 = vpack.c.b16 %v1322, %v1320
    %v1379 = vpack.c.b16 %v1325, %v1323
    %v1380 = vpack.c.b16 %v1326, %v1324
    %v1381 = vpack.c.b16 %v1329, %v1327
    %v1382 = vpack.c.b16 %v1330, %v1328
    %v1383 = vpack.c.b16 %v1333, %v1331
    %v1384 = vpack.c.b16 %v1334, %v1332
    %v1385 = vpack.c.b16 %v1337, %v1335
    %v1386 = vpack.c.b16 %v1338, %v1336
    %v1387 = vpack.c.b16 %v1341, %v1339
    %v1388 = vpack.c.b16 %v1342, %v1340
    %v1389 = vpack.c.b16 %v1345, %v1343
    %v1390 = vpack.c.b16 %v1346, %v1344
    %v1391 = vpack.c.b16 %v1349, %v1347
    %v1392 = vpack.c.b16 %v1350, %v1348
    %v1393 = vpack.c.b16 %v1353, %v1351
    %v1394 = vpack.c.b16 %v1354, %v1352
    %v1395 = vpack.c.b16 %v1357, %v1355
    %v1396 = vpack.c.b16 %v1358, %v1356
    %v1397 = vpack.c.b16 %v1361, %v1359
    %v1398 = vpack.c.b16 %v1362, %v1360
    %v1399 = vpack.c.b16 %v1365, %v1363
    %v1400 = vpack.c.b16 %v1366, %v1364
    %v1401 = vpack.c.b16 %v1369, %v1367
    %v1402 = vpack.c.b16 %v1370, %v1368
    %1435 = vmatprep.subr.bf16.mxu0 %v1372
    %1436 = vmatpush1.bf16.msra.mxu0 %v1371
    %1437 = vmatprep.subr.bf16.mxu0 %v1374
    %1438 = vmatpush1.bf16.msra.mxu0 %v1373
    %1439 = vmatprep.subr.bf16.mxu0 %v1376
    %1440 = vmatpush1.bf16.msra.mxu0 %v1375
    %1441 = vmatprep.subr.bf16.mxu0 %v1378
    %1442 = vmatpush1.bf16.msra.mxu0 %v1377
    %1443 = vmatprep.subr.bf16.mxu0 %v1380
    %1444 = vmatpush1.bf16.msra.mxu0 %v1379
    %1445 = vmatprep.subr.bf16.mxu0 %v1382
    %1446 = vmatpush1.bf16.msra.mxu0 %v1381
    %1447 = vmatprep.subr.bf16.mxu0 %v1384
    %1448 = vmatpush1.bf16.msra.mxu0 %v1383
    %1449 = vmatprep.subr.bf16.mxu0 %v1386
    %1450 = vmatpush1.bf16.msra.mxu0 %v1385
    %1451 = vmatprep.subr.bf16.mxu0 %v1388
    %1452 = vmatpush1.bf16.msra.mxu0 %v1387
    %1453 = vmatprep.subr.bf16.mxu0 %v1390
    %1454 = vmatpush1.bf16.msra.mxu0 %v1389
    %1455 = vmatprep.subr.bf16.mxu0 %v1392
    %1456 = vmatpush1.bf16.msra.mxu0 %v1391
    %1457 = vmatprep.subr.bf16.mxu0 %v1394
    %1458 = vmatpush1.bf16.msra.mxu0 %v1393
    %1459 = vmatprep.subr.bf16.mxu0 %v1396
    %1460 = vmatpush1.bf16.msra.mxu0 %v1395
    %1461 = vmatprep.subr.bf16.mxu0 %v1398
    %1462 = vmatpush1.bf16.msra.mxu0 %v1397
    %1463 = vmatprep.subr.bf16.mxu0 %v1400
    %1464 = vmatpush1.bf16.msra.mxu0 %v1399
    %1465 = vmatprep.subr.bf16.mxu0 %v1402
    %1466 = vmatpush1.bf16.msra.mxu0 %v1401
    %1467 = vmatprep.mubr.bf16.mxu0 %v1229
    %1468 = vmatmul.mubr.bf16.gmra.mrb[0].mxu0 %v1228
    %v1469 = vpop.f32.mrb[0].mxu0
    %v1470 = vadd.f32 %v1268, %v1469
    %v1471 = vpop.f32.mrb[0].mxu0
    %v1472 = vadd.f32 %v1272, %v1471
    %v1473 = vpop.f32.mrb[0].mxu0
    %v1474 = vadd.f32 %v1268, %v1473
    %v1475 = vpop.f32.mrb[0].mxu0
    %v1476 = vadd.f32 %v1272, %v1475
    %1477 = vmatprep.mubr.bf16.mxu0 %v1231
    %1478 = vmatmul.mubr.bf16.gmra.mrb[0].mxu0 %v1230
    %v1479 = vpop.f32.mrb[0].mxu0
    %v1480 = vadd.f32 %v1268, %v1479
    %v1481 = vpop.f32.mrb[0].mxu0
    %v1482 = vadd.f32 %v1272, %v1481
    %v1483 = vpop.f32.mrb[0].mxu0
    %v1484 = vadd.f32 %v1268, %v1483
    %v1485 = vpop.f32.mrb[0].mxu0
    %v1486 = vadd.f32 %v1272, %v1485
    %1487 = vdwg.mxu0
    %1488 = vst [vmem:[%s10] sm:$0xff] %v1470
    %1489 = vst [vmem:[%s10 + $0x8] sm:$0xff] %v1472
    %1490 = vst [vmem:[%s10 + $0x10] sm:$0xff] %v1474
    %1491 = vst [vmem:[%s10 + $0x18] sm:$0xff] %v1476
    %1492 = vst [vmem:[%s10 + $0x20] sm:$0xff] %v1480
    %1493 = vst [vmem:[%s10 + $0x28] sm:$0xff] %v1482
    %1494 = vst [vmem:[%s10 + $0x30] sm:$0xff] %v1484
    %1495 = vst [vmem:[%s10 + $0x38] sm:$0xff] %v1486
    // Predicated region
    $region58: #{counterfactual_forward.1} parent=1 // pred_check
      _
    $region59: #{counterfactual_forward.1} parent=1 // pred_check_branch
      %1497 = sbr.rel (0) target = $region61
    $region60: #{counterfactual_forward.1} parent=1 // pred_region
      _
    $region61: #{counterfactual_forward.1} parent=1 // pred_fallthru
      _
    // Predicated region
    $region62: #{counterfactual_forward.1} parent=1 // pred_check
      _
    $region63: #{counterfactual_forward.1} parent=1 // pred_check_branch
      %1499 = sbr.rel (0) target = $region65
    $region64: #{counterfactual_forward.1} parent=1 // pred_region
      _
    $region65: #{counterfactual_forward.1} parent=1 // pred_fallthru
      _
    %1500 = vsyncpa [#allocation3], 1
    %1501 = vsyncpa [#allocation5], 1
    %1502 = vsyncpa [#allocation8], 1

</llo_original>
